<compile_context>
chip_gen: v7x
topology: tpu7x:2x2x1
jax: 0.10.0
libtpu: 0.0.40
codegen_flags: <defaults>
</compile_context>

<pallas_src>
import math
from functools import partial

import jax
import jax.numpy as jnp
from jax.experimental import pallas as pl
from jax.experimental.pallas import tpu as pltpu


def _self_attention_kernel(x_ref, g_ref, be_ref,
                           wqkv_ref, bqkv_ref,
                           wo_ref, bo_ref,
                           o_ref,
                           qkv_scr, attn_scr,
                           *, num_heads: int, eps: float,
                           s_actual: int, s_pad: int, q_tile: int,
                           group_heads: int, approx_recip: bool):
    C = x_ref.shape[2]
    H = num_heads
    Dh = C // H
    G = group_heads
    GW = G * Dh
    n_groups = H // G
    j = pl.program_id(1)

    # ---- Once per batch index: LayerNorm + fused QKV projection, written to a
    # persistent bf16 VMEM slab that is carried across the query-tile axis.
    # (1/sqrt(Dh) is already folded into the Q columns of wqkv / bqkv.)
    @pl.when(j == 0)
    def _():
        x = x_ref[0].astype(jnp.float32)                          # (S_pad, C)
        mean = jnp.mean(x, axis=-1, keepdims=True)
        var = jnp.mean((x - mean) ** 2, axis=-1, keepdims=True)
        xn = (x - mean) * jax.lax.rsqrt(var + eps)
        xn = xn * g_ref[0] + be_ref[0]
        qkv = jnp.dot(xn.astype(jnp.bfloat16), wqkv_ref[...],
                      preferred_element_type=jnp.float32) + bqkv_ref[0]
        qkv_scr[...] = qkv.astype(jnp.bfloat16)                   # (S_pad, 3C)

    # Static -inf bias for padded key columns (only when the seq was padded).
    if s_pad > s_actual:
        col = jax.lax.broadcasted_iota(jnp.int32, (1, s_pad), 1)
        pad_bias = jnp.where(col < s_actual, 0.0, -1e30).astype(jnp.float32)
    else:
        pad_bias = None

    if q_tile == s_pad:
        q_start = 0
    else:
        q_start = pl.multiple_of(j * q_tile, q_tile)

    # ---- Per-head attention; heads processed in groups of G so the attention
    # slab stores are contiguous, lane-aligned GW-wide stores.
    for g in range(n_groups):
        lo = g * GW
        if q_tile == s_pad:
            q_g = qkv_scr[:, lo:lo + GW]                          # (TQ, GW) bf16
        else:
            q_g = qkv_scr[pl.ds(q_start, q_tile), lo:lo + GW]
        k_g = qkv_scr[:, C + lo:C + lo + GW]                      # (S_pad, GW) bf16
        v_g = qkv_scr[:, 2 * C + lo:2 * C + lo + GW]              # (S_pad, GW) bf16

        outs = []
        for h in range(G):
            sl = slice(h * Dh, (h + 1) * Dh)
            s = jax.lax.dot_general(
                q_g[:, sl], k_g[:, sl],
                dimension_numbers=(((1,), (1,)), ((), ())),
                preferred_element_type=jnp.float32)               # (TQ, S_pad)
            if pad_bias is not None:
                s = s + pad_bias
            s = s - jnp.max(s, axis=-1, keepdims=True)
            p = jnp.exp(s)
            denom = jnp.sum(p, axis=-1, keepdims=True)            # (TQ, 1) f32
            head = jnp.dot(p.astype(jnp.bfloat16), v_g[:, sl],
                           preferred_element_type=jnp.float32)    # (TQ, Dh) f32
            if approx_recip:
                outs.append(head * pl.reciprocal(denom, approx=True))
            else:
                outs.append(head / denom)
        grp = outs[0] if G == 1 else jnp.concatenate(outs, axis=1)  # (TQ, GW)
        attn_scr[:, lo:lo + GW] = grp.astype(jnp.bfloat16)

    # ---- Output projection (bf16 slab x bf16 Wo, f32 accumulate).
    out = jnp.dot(attn_scr[...], wo_ref[...],
                  preferred_element_type=jnp.float32) + bo_ref[0]
    o_ref[0] = out.astype(o_ref.dtype)


def _is_v5():
    try:
        return "v5" in jax.devices()[0].device_kind.lower()
    except Exception:
        return False


def _vmem_capacity_bytes():
    try:
        return int(pltpu.get_tpu_info().vmem_capacity_bytes)
    except Exception:
        return 64 * 2**20


def _pick_tiles(S):
    """Returns (TQ, S_pad)."""
    if S <= 256:
        return S, S
    tq = 128 if _is_v5() else 256           # 256-wide MXU on v6e/v7x
    s_pad = ((S + tq - 1) // tq) * tq
    return tq, s_pad


def _pick_head_group(num_heads, dh):
    """Largest divisor G of num_heads with G*dh <= 128 (lane-aligned stores)."""
    for g in range(num_heads, 0, -1):
        if num_heads % g == 0 and g * dh <= 128:
            return g
    return 1


def _vmem_limit_bytes(s_pad, C, tq, x_bytes, out_bytes):
    f32, bf16 = 4, 2
    need = 0
    need += 2 * s_pad * C * x_bytes                 # x block (double-buffered)
    need += 2 * tq * C * out_bytes                  # out block (double-buffered)
    need += C * 3 * C * bf16                        # fused Wqkv (single-buffered)
    need += C * C * bf16                            # Wo (single-buffered)
    need += 6 * 8 * C * f32                         # biases / LN params (padded rows)
    need += s_pad * 3 * C * bf16                    # persistent QKV scratch
    need += tq * C * bf16                           # attention slab scratch
    need += s_pad * C * f32 + s_pad * 3 * C * f32   # LN / f32 qkv live once per batch
    need += 3 * tq * s_pad * f32                    # scores / probs live values
    need = int(need * 1.2) + (4 << 20)              # compiler-internal headroom
    cap = int(_vmem_capacity_bytes() * 0.75)        # ~48 MiB v7x, ~96 MiB v5e/v6e
    return max(32 << 20, min(need, cap))


def self_attention_pallas(x, params, num_heads: int, eps: float = 1e-5,
                          approx_recip: bool = True):
    """x: (B, S, C) float32 or bfloat16; params: LayerNorm + MHA weights."""
    B, S, C = x.shape
    assert C % num_heads == 0
    Dh = C // num_heads
    scale = 1.0 / math.sqrt(Dh)

    TQ, S_pad = _pick_tiles(S)
    num_q_tiles = S_pad // TQ
    G = _pick_head_group(num_heads, Dh)

    if S_pad != S:
        x = jnp.pad(x, ((0, 0), (0, S_pad - S), (0, 0)))

    # Torch linear weights are (out, in); pre-transpose so the kernel does x @ W.
    # Fuse Q/K/V into one (C, 3C) weight and fold 1/sqrt(Dh) into the Q columns.
    wqkv = jnp.concatenate(
        [params["wq"].T * scale, params["wk"].T, params["wv"].T], axis=1)
    bqkv = jnp.concatenate(
        [params["bq"] * scale, params["bk"], params["bv"]]
    ).reshape(1, 3 * C).astype(jnp.float32)
    wqkv_bf = wqkv.astype(jnp.bfloat16)
    wo_bf = params["wo"].T.astype(jnp.bfloat16)
    bo = params["bo"].reshape(1, C).astype(jnp.float32)
    gamma = params["ln_gamma"].reshape(1, C).astype(jnp.float32)
    beta = params["ln_beta"].reshape(1, C).astype(jnp.float32)

    kernel = partial(_self_attention_kernel, num_heads=num_heads, eps=eps,
                     s_actual=S, s_pad=S_pad, q_tile=TQ, group_heads=G,
                     approx_recip=approx_recip)

    x_bytes = jnp.dtype(x.dtype).itemsize
    out_dtype = x.dtype
    out_bytes = jnp.dtype(out_dtype).itemsize
    vmem_limit = _vmem_limit_bytes(S_pad, C, TQ, x_bytes, out_bytes)

    def _make_call(single_buffer_consts: bool):
        def const_spec(shape):
            idx = lambda b, j: (0,) * len(shape)
            if single_buffer_consts:
                # Grid-invariant operands: single-buffered (halves their VMEM).
                return pl.BlockSpec(shape, idx, pipeline_mode=pl.Buffered(1))
            return pl.BlockSpec(shape, idx)

        return pl.pallas_call(
            kernel,
            out_shape=jax.ShapeDtypeStruct((B, S_pad, C), out_dtype),
            grid_spec=pltpu.PrefetchScalarGridSpec(
                num_scalar_prefetch=0,
                grid=(B, num_q_tiles),
                in_specs=[
                    pl.BlockSpec((1, S_pad, C), lambda b, j: (b, 0, 0)),  # x
                    const_spec((1, C)),          # ln gamma
                    const_spec((1, C)),          # ln beta
                    const_spec((C, 3 * C)),      # fused Wqkv^T (bf16, pre-scaled Q)
                    const_spec((1, 3 * C)),      # fused bqkv (f32)
                    const_spec((C, C)),          # Wo^T (bf16)
                    const_spec((1, C)),          # bo
                ],
                out_specs=pl.BlockSpec((1, TQ, C), lambda b, j: (b, j, 0)),
                scratch_shapes=[
                    pltpu.VMEM((S_pad, 3 * C), jnp.bfloat16),  # LN+QKV, per batch
                    pltpu.VMEM((TQ, C), jnp.bfloat16),         # attention slab
                ],
            ),
            compiler_params=pltpu.CompilerParams(
                # b is independent (megacore-shardable); j carries the QKV scratch.
                dimension_semantics=("parallel", "arbitrary"),
                vmem_limit_bytes=vmem_limit),
        )

    operands = (x, gamma, beta, wqkv_bf, bqkv, wo_bf, bo)
    try:
        out = _make_call(True)(*operands)
    except Exception:
        # Fallback if single-buffered (Buffered(1)) constant blocks are rejected.
        out = _make_call(False)(*operands)

    if S_pad != S:
        out = out[:, :S, :]
    return out


def self_attention_reference(x, params, num_heads: int, eps: float = 1e-5):
    """Pure-JAX reference matching nn.LayerNorm + nn.MultiheadAttention (eval)."""
    B, S, C = x.shape
    Dh = C // num_heads
    mean = jnp.mean(x, axis=-1, keepdims=True)
    var = jnp.mean((x - mean) ** 2, axis=-1, keepdims=True)
    xn = (x - mean) / jnp.sqrt(var + eps)
    xn = xn * params["ln_gamma"] + params["ln_beta"]

    hp = jax.lax.Precision.HIGHEST
    q = jnp.einsum("bsc,oc->bso", xn, params["wq"], precision=hp) + params["bq"]
    k = jnp.einsum("bsc,oc->bso", xn, params["wk"], precision=hp) + params["bk"]
    v = jnp.einsum("bsc,oc->bso", xn, params["wv"], precision=hp) + params["bv"]

    def split(t):
        return t.reshape(B, S, num_heads, Dh).transpose(0, 2, 1, 3)  # (B,H,S,Dh)

    qh, kh, vh = split(q), split(k), split(v)
    s = jnp.einsum("bhqd,bhkd->bhqk", qh, kh, precision=hp) / math.sqrt(Dh)
    p = jax.nn.softmax(s, axis=-1)
    o = jnp.einsum("bhqk,bhkd->bhqd", p, vh, precision=hp)
    o = o.transpose(0, 2, 1, 3).reshape(B, S, C)
    return jnp.einsum("bsc,oc->bso", o, params["wo"], precision=hp) + params["bo"]


def make_params(key, num_channels: int):
    C = num_channels
    ks = jax.random.split(key, 6)
    scale = 1.0 / math.sqrt(C)
    # in_proj_weight (3C, C) split into Wq/Wk/Wv; out_proj (C, C).
    in_proj_w = jax.random.uniform(ks[0], (3 * C, C), jnp.float32, -scale, scale)
    in_proj_b = jax.random.uniform(ks[1], (3 * C,), jnp.float32, -scale, scale)
    wo = jax.random.uniform(ks[2], (C, C), jnp.float32, -scale, scale)
    bo = jax.random.uniform(ks[3], (C,), jnp.float32, -scale, scale)
    return {
        "ln_gamma": jnp.ones((C,), jnp.float32),
        "ln_beta": jnp.zeros((C,), jnp.float32),
        "wq": in_proj_w[0 * C:1 * C],
        "wk": in_proj_w[1 * C:2 * C],
        "wv": in_proj_w[2 * C:3 * C],
        "bq": in_proj_b[0 * C:1 * C],
        "bk": in_proj_b[1 * C:2 * C],
        "bv": in_proj_b[2 * C:3 * C],
        "wo": wo,
        "bo": bo,
    }


if __name__ == "__main__":
    key = jax.random.PRNGKey(0)
    kx1, kp1, kx2, kp2 = jax.random.split(key, 4)

    # --- Test 1: small shapes, single query tile (no padding / tiling).
    B, S, C, H = 2, 8, 32, 4
    x = jax.random.normal(kx1, (B, S, C), jnp.float32)
    params = make_params(kp1, C)
    out = jax.block_until_ready(self_attention_pallas(x, params, num_heads=H))
    ref = jax.block_until_ready(self_attention_reference(x, params, num_heads=H))
    assert out.shape == (B, S, C)
    # bf16 MXU operands (f32 accumulate) -> slightly relaxed tolerance.
    assert jnp.allclose(out, ref, atol=2e-2, rtol=2e-2), (
        f"test1 max abs diff {jnp.max(jnp.abs(out - ref))}")

    # --- Test 2: exercises query tiling, padded-key masking, head grouping,
    # and the hoisted once-per-batch LN+QKV scratch (S=330 is not a tile multiple).
    B2, S2, C2, H2 = 2, 330, 128, 4
    x2 = jax.random.normal(kx2, (B2, S2, C2), jnp.float32)
    params2 = make_params(kp2, C2)
    out2 = jax.block_until_ready(self_attention_pallas(x2, params2, num_heads=H2))
    ref2 = jax.block_until_ready(self_attention_reference(x2, params2, num_heads=H2))
    assert out2.shape == (B2, S2, C2)
    assert jnp.allclose(out2, ref2, atol=2e-2, rtol=2e-2), (
        f"test2 max abs diff {jnp.max(jnp.abs(out2 - ref2))}")

    print("KERNEL_OK")
</pallas_src>

<mosaic_0001>
module attributes {stable_mosaic.version = 11 : i64} {
  func.func @_self_attention_kernel(%arg0: i32, %arg1: i32, %arg2: memref<1x8x32xf32, #tpu.memory_space<vmem>>, %arg3: memref<1x32xf32, #tpu.memory_space<vmem>>, %arg4: memref<1x32xf32, #tpu.memory_space<vmem>>, %arg5: memref<32x96xbf16, #tpu.memory_space<vmem>>, %arg6: memref<1x96xf32, #tpu.memory_space<vmem>>, %arg7: memref<32x32xbf16, #tpu.memory_space<vmem>>, %arg8: memref<1x32xf32, #tpu.memory_space<vmem>>, %arg9: memref<1x8x32xf32, #tpu.memory_space<vmem>>, %arg10: memref<8x96xbf16, #tpu.memory_space<vmem>>, %arg11: memref<8x32xbf16, #tpu.memory_space<vmem>>) attributes {dimension_semantics = [#tpu.dimension_semantics<parallel>, #tpu.dimension_semantics<arbitrary>], iteration_bounds = array<i64: 2, 1>, scalar_prefetch = 0 : i64, scratch_operands = 2 : i64, tpu.core_type = #tpu.core_type<tc>, window_params = [{transform_indices = @transform_0, window_bounds = array<i64: 1, 8, 32>}, {pipeline_mode = #tpu.pipeline_mode<synchronous>, transform_indices = @transform_1, window_bounds = array<i64: 1, 32>}, {pipeline_mode = #tpu.pipeline_mode<synchronous>, transform_indices = @transform_2, window_bounds = array<i64: 1, 32>}, {pipeline_mode = #tpu.pipeline_mode<synchronous>, transform_indices = @transform_3, window_bounds = array<i64: 32, 96>}, {pipeline_mode = #tpu.pipeline_mode<synchronous>, transform_indices = @transform_4, window_bounds = array<i64: 1, 96>}, {pipeline_mode = #tpu.pipeline_mode<synchronous>, transform_indices = @transform_5, window_bounds = array<i64: 32, 32>}, {pipeline_mode = #tpu.pipeline_mode<synchronous>, transform_indices = @transform_6, window_bounds = array<i64: 1, 32>}, {transform_indices = @transform_7, window_bounds = array<i64: 1, 8, 32>}]} {
    %c0_i32 = arith.constant 0 : i32
    %0 = arith.cmpi eq, %arg1, %c0_i32 : i32
    %1 = arith.extui %0 : i1 to i32
    %c0_i32_0 = arith.constant 0 : i32
    %2 = arith.cmpi ne, %1, %c0_i32_0 : i32
    scf.if %2 {
      %c0_31 = arith.constant 0 : index
      %c0_32 = arith.constant 0 : index
      %c0_33 = arith.constant 0 : index
      %84 = vector.load %arg2[%c0_31, %c0_32, %c0_33] : memref<1x8x32xf32, #tpu.memory_space<vmem>>, vector<1x8x32xf32>
      %85 = vector.shape_cast %84 : vector<1x8x32xf32> to vector<8x32xf32>
      %cst_34 = arith.constant dense<0.000000e+00> : vector<8xf32>
      %86 = vector.multi_reduction <add>, %85, %cst_34 [1] : vector<8x32xf32> to vector<8xf32>
      %87 = vector.shape_cast %86 : vector<8xf32> to vector<8x1xf32>
      %cst_35 = arith.constant 3.200000e+01 : f32
      %88 = vector.broadcast %cst_35 : f32 to vector<8x1xf32>
      %89 = arith.divf %87, %88 : vector<8x1xf32>
      %90 = vector.broadcast %89 : vector<8x1xf32> to vector<8x32xf32>
      %91 = arith.subf %85, %90 : vector<8x32xf32>
      %92 = arith.mulf %91, %91 : vector<8x32xf32>
      %cst_36 = arith.constant dense<0.000000e+00> : vector<8xf32>
      %93 = vector.multi_reduction <add>, %92, %cst_36 [1] : vector<8x32xf32> to vector<8xf32>
      %94 = vector.shape_cast %93 : vector<8xf32> to vector<8x1xf32>
      %cst_37 = arith.constant 3.200000e+01 : f32
      %95 = vector.broadcast %cst_37 : f32 to vector<8x1xf32>
      %96 = arith.divf %94, %95 : vector<8x1xf32>
      %97 = vector.broadcast %89 : vector<8x1xf32> to vector<8x32xf32>
      %98 = arith.subf %85, %97 : vector<8x32xf32>
      %cst_38 = arith.constant 9.99999974E-6 : f32
      %99 = vector.broadcast %cst_38 : f32 to vector<8x1xf32>
      %100 = arith.addf %96, %99 : vector<8x1xf32>
      %101 = math.rsqrt %100 : vector<8x1xf32>
      %102 = vector.broadcast %101 : vector<8x1xf32> to vector<8x32xf32>
      %103 = arith.mulf %98, %102 : vector<8x32xf32>
      %c0_39 = arith.constant 0 : index
      %c0_40 = arith.constant 0 : index
      %104 = vector.load %arg3[%c0_39, %c0_40] : memref<1x32xf32, #tpu.memory_space<vmem>>, vector<1x32xf32>
      %105 = vector.shape_cast %104 : vector<1x32xf32> to vector<32xf32>
      %106 = vector.shape_cast %105 : vector<32xf32> to vector<1x32xf32>
      %107 = vector.broadcast %106 : vector<1x32xf32> to vector<8x32xf32>
      %108 = arith.mulf %103, %107 : vector<8x32xf32>
      %c0_41 = arith.constant 0 : index
      %c0_42 = arith.constant 0 : index
      %109 = vector.load %arg4[%c0_41, %c0_42] : memref<1x32xf32, #tpu.memory_space<vmem>>, vector<1x32xf32>
      %110 = vector.shape_cast %109 : vector<1x32xf32> to vector<32xf32>
      %111 = vector.shape_cast %110 : vector<32xf32> to vector<1x32xf32>
      %112 = vector.broadcast %111 : vector<1x32xf32> to vector<8x32xf32>
      %113 = arith.addf %108, %112 : vector<8x32xf32>
      %114 = arith.truncf %113 : vector<8x32xf32> to vector<8x32xbf16>
      %c0_43 = arith.constant 0 : index
      %c0_44 = arith.constant 0 : index
      %115 = vector.load %arg5[%c0_43, %c0_44] : memref<32x96xbf16, #tpu.memory_space<vmem>>, vector<32x96xbf16>
      %cst_45 = arith.constant dense<0.000000e+00> : vector<8x96xf32>
      %116 = tpu.matmul %114, %115, %cst_45 {dimension_numbers = #tpu.dot_dimension_numbers<[1], [0], [0], [1], [0, 0, 1, 1], [], []>} : vector<8x32xbf16>, vector<32x96xbf16>, vector<8x96xf32> -> vector<8x96xf32>
      %c0_46 = arith.constant 0 : index
      %c0_47 = arith.constant 0 : index
      %117 = vector.load %arg6[%c0_46, %c0_47] : memref<1x96xf32, #tpu.memory_space<vmem>>, vector<1x96xf32>
      %118 = vector.shape_cast %117 : vector<1x96xf32> to vector<96xf32>
      %119 = vector.shape_cast %118 : vector<96xf32> to vector<1x96xf32>
      %120 = vector.broadcast %119 : vector<1x96xf32> to vector<8x96xf32>
      %121 = arith.addf %116, %120 : vector<8x96xf32>
      %122 = arith.truncf %121 : vector<8x96xf32> to vector<8x96xbf16>
      %c0_48 = arith.constant 0 : index
      %c0_49 = arith.constant 0 : index
      %123 = vector.load %arg10[%c0_48, %c0_49] : memref<8x96xbf16, #tpu.memory_space<vmem>>, vector<8x96xbf16>
      tpu.vector_store %arg10[%c0_48, %c0_49], %122 {strides = array<i32>} : memref<8x96xbf16, #tpu.memory_space<vmem>>, vector<8x96xbf16>,
    } else {
    }
    %c0 = arith.constant 0 : index
    %c0_1 = arith.constant 0 : index
    %3 = vector.load %arg10[%c0, %c0_1] : memref<8x96xbf16, #tpu.memory_space<vmem>>, vector<8x32xbf16>
    %c0_2 = arith.constant 0 : index
    %c32 = arith.constant 32 : index
    %4 = vector.load %arg10[%c0_2, %c32] : memref<8x96xbf16, #tpu.memory_space<vmem>>, vector<8x32xbf16>
    %c0_3 = arith.constant 0 : index
    %c64 = arith.constant 64 : index
    %5 = vector.load %arg10[%c0_3, %c64] : memref<8x96xbf16, #tpu.memory_space<vmem>>, vector<8x32xbf16>
    %6 = vector.extract_strided_slice %3 {offsets = [0, 0], sizes = [8, 8], strides = [1, 1]} : vector<8x32xbf16> to vector<8x8xbf16>
    %7 = vector.extract_strided_slice %4 {offsets = [0, 0], sizes = [8, 8], strides = [1, 1]} : vector<8x32xbf16> to vector<8x8xbf16>
    %cst = arith.constant dense<0.000000e+00> : vector<8x8xf32>
    %8 = tpu.matmul %6, %7, %cst {dimension_numbers = #tpu.dot_dimension_numbers<[1], [1], [0], [0], [0, 0, 1, 0], [], []>} : vector<8x8xbf16>, vector<8x8xbf16>, vector<8x8xf32> -> vector<8x8xf32>
    %cst_4 = arith.constant dense<0xFF800000> : vector<8xf32>
    %9 = vector.multi_reduction <maximumf>, %8, %cst_4 [1] : vector<8x8xf32> to vector<8xf32>
    %10 = vector.shape_cast %9 : vector<8xf32> to vector<8x1xf32>
    %11 = vector.broadcast %10 : vector<8x1xf32> to vector<8x8xf32>
    %12 = arith.subf %8, %11 : vector<8x8xf32>
    %13 = math.exp %12 : vector<8x8xf32>
    %cst_5 = arith.constant dense<0.000000e+00> : vector<8xf32>
    %14 = vector.multi_reduction <add>, %13, %cst_5 [1] : vector<8x8xf32> to vector<8xf32>
    %15 = vector.shape_cast %14 : vector<8xf32> to vector<8x1xf32>
    %16 = arith.truncf %13 : vector<8x8xf32> to vector<8x8xbf16>
    %17 = vector.extract_strided_slice %5 {offsets = [0, 0], sizes = [8, 8], strides = [1, 1]} : vector<8x32xbf16> to vector<8x8xbf16>
    %cst_6 = arith.constant dense<0.000000e+00> : vector<8x8xf32>
    %18 = tpu.matmul %16, %17, %cst_6 {dimension_numbers = #tpu.dot_dimension_numbers<[1], [0], [0], [1], [0, 0, 1, 1], [], []>} : vector<8x8xbf16>, vector<8x8xbf16>, vector<8x8xf32> -> vector<8x8xf32>
    %19 = tpu.reciprocal %15 {approx = true} : vector<8x1xf32> -> vector<8x1xf32>
    %20 = vector.broadcast %19 : vector<8x1xf32> to vector<8x8xf32>
    %21 = arith.mulf %18, %20 : vector<8x8xf32>
    %22 = vector.extract_strided_slice %3 {offsets = [0, 8], sizes = [8, 8], strides = [1, 1]} : vector<8x32xbf16> to vector<8x8xbf16>
    %23 = vector.extract_strided_slice %4 {offsets = [0, 8], sizes = [8, 8], strides = [1, 1]} : vector<8x32xbf16> to vector<8x8xbf16>
    %cst_7 = arith.constant dense<0.000000e+00> : vector<8x8xf32>
    %24 = tpu.matmul %22, %23, %cst_7 {dimension_numbers = #tpu.dot_dimension_numbers<[1], [1], [0], [0], [0, 0, 1, 0], [], []>} : vector<8x8xbf16>, vector<8x8xbf16>, vector<8x8xf32> -> vector<8x8xf32>
    %cst_8 = arith.constant dense<0xFF800000> : vector<8xf32>
    %25 = vector.multi_reduction <maximumf>, %24, %cst_8 [1] : vector<8x8xf32> to vector<8xf32>
    %26 = vector.shape_cast %25 : vector<8xf32> to vector<8x1xf32>
    %27 = vector.broadcast %26 : vector<8x1xf32> to vector<8x8xf32>
    %28 = arith.subf %24, %27 : vector<8x8xf32>
    %29 = math.exp %28 : vector<8x8xf32>
    %cst_9 = arith.constant dense<0.000000e+00> : vector<8xf32>
    %30 = vector.multi_reduction <add>, %29, %cst_9 [1] : vector<8x8xf32> to vector<8xf32>
    %31 = vector.shape_cast %30 : vector<8xf32> to vector<8x1xf32>
    %32 = arith.truncf %29 : vector<8x8xf32> to vector<8x8xbf16>
    %33 = vector.extract_strided_slice %5 {offsets = [0, 8], sizes = [8, 8], strides = [1, 1]} : vector<8x32xbf16> to vector<8x8xbf16>
    %cst_10 = arith.constant dense<0.000000e+00> : vector<8x8xf32>
    %34 = tpu.matmul %32, %33, %cst_10 {dimension_numbers = #tpu.dot_dimension_numbers<[1], [0], [0], [1], [0, 0, 1, 1], [], []>} : vector<8x8xbf16>, vector<8x8xbf16>, vector<8x8xf32> -> vector<8x8xf32>
    %35 = tpu.reciprocal %31 {approx = true} : vector<8x1xf32> -> vector<8x1xf32>
    %36 = vector.broadcast %35 : vector<8x1xf32> to vector<8x8xf32>
    %37 = arith.mulf %34, %36 : vector<8x8xf32>
    %38 = vector.extract_strided_slice %3 {offsets = [0, 16], sizes = [8, 8], strides = [1, 1]} : vector<8x32xbf16> to vector<8x8xbf16>
    %39 = vector.extract_strided_slice %4 {offsets = [0, 16], sizes = [8, 8], strides = [1, 1]} : vector<8x32xbf16> to vector<8x8xbf16>
    %cst_11 = arith.constant dense<0.000000e+00> : vector<8x8xf32>
    %40 = tpu.matmul %38, %39, %cst_11 {dimension_numbers = #tpu.dot_dimension_numbers<[1], [1], [0], [0], [0, 0, 1, 0], [], []>} : vector<8x8xbf16>, vector<8x8xbf16>, vector<8x8xf32> -> vector<8x8xf32>
    %cst_12 = arith.constant dense<0xFF800000> : vector<8xf32>
    %41 = vector.multi_reduction <maximumf>, %40, %cst_12 [1] : vector<8x8xf32> to vector<8xf32>
    %42 = vector.shape_cast %41 : vector<8xf32> to vector<8x1xf32>
    %43 = vector.broadcast %42 : vector<8x1xf32> to vector<8x8xf32>
    %44 = arith.subf %40, %43 : vector<8x8xf32>
    %45 = math.exp %44 : vector<8x8xf32>
    %cst_13 = arith.constant dense<0.000000e+00> : vector<8xf32>
    %46 = vector.multi_reduction <add>, %45, %cst_13 [1] : vector<8x8xf32> to vector<8xf32>
    %47 = vector.shape_cast %46 : vector<8xf32> to vector<8x1xf32>
    %48 = arith.truncf %45 : vector<8x8xf32> to vector<8x8xbf16>
    %49 = vector.extract_strided_slice %5 {offsets = [0, 16], sizes = [8, 8], strides = [1, 1]} : vector<8x32xbf16> to vector<8x8xbf16>
    %cst_14 = arith.constant dense<0.000000e+00> : vector<8x8xf32>
    %50 = tpu.matmul %48, %49, %cst_14 {dimension_numbers = #tpu.dot_dimension_numbers<[1], [0], [0], [1], [0, 0, 1, 1], [], []>} : vector<8x8xbf16>, vector<8x8xbf16>, vector<8x8xf32> -> vector<8x8xf32>
    %51 = tpu.reciprocal %47 {approx = true} : vector<8x1xf32> -> vector<8x1xf32>
    %52 = vector.broadcast %51 : vector<8x1xf32> to vector<8x8xf32>
    %53 = arith.mulf %50, %52 : vector<8x8xf32>
    %54 = vector.extract_strided_slice %3 {offsets = [0, 24], sizes = [8, 8], strides = [1, 1]} : vector<8x32xbf16> to vector<8x8xbf16>
    %55 = vector.extract_strided_slice %4 {offsets = [0, 24], sizes = [8, 8], strides = [1, 1]} : vector<8x32xbf16> to vector<8x8xbf16>
    %cst_15 = arith.constant dense<0.000000e+00> : vector<8x8xf32>
    %56 = tpu.matmul %54, %55, %cst_15 {dimension_numbers = #tpu.dot_dimension_numbers<[1], [1], [0], [0], [0, 0, 1, 0], [], []>} : vector<8x8xbf16>, vector<8x8xbf16>, vector<8x8xf32> -> vector<8x8xf32>
    %cst_16 = arith.constant dense<0xFF800000> : vector<8xf32>
    %57 = vector.multi_reduction <maximumf>, %56, %cst_16 [1] : vector<8x8xf32> to vector<8xf32>
    %58 = vector.shape_cast %57 : vector<8xf32> to vector<8x1xf32>
    %59 = vector.broadcast %58 : vector<8x1xf32> to vector<8x8xf32>
    %60 = arith.subf %56, %59 : vector<8x8xf32>
    %61 = math.exp %60 : vector<8x8xf32>
    %cst_17 = arith.constant dense<0.000000e+00> : vector<8xf32>
    %62 = vector.multi_reduction <add>, %61, %cst_17 [1] : vector<8x8xf32> to vector<8xf32>
    %63 = vector.shape_cast %62 : vector<8xf32> to vector<8x1xf32>
    %64 = arith.truncf %61 : vector<8x8xf32> to vector<8x8xbf16>
    %65 = vector.extract_strided_slice %5 {offsets = [0, 24], sizes = [8, 8], strides = [1, 1]} : vector<8x32xbf16> to vector<8x8xbf16>
    %cst_18 = arith.constant dense<0.000000e+00> : vector<8x8xf32>
    %66 = tpu.matmul %64, %65, %cst_18 {dimension_numbers = #tpu.dot_dimension_numbers<[1], [0], [0], [1], [0, 0, 1, 1], [], []>} : vector<8x8xbf16>, vector<8x8xbf16>, vector<8x8xf32> -> vector<8x8xf32>
    %67 = tpu.reciprocal %63 {approx = true} : vector<8x1xf32> -> vector<8x1xf32>
    %68 = vector.broadcast %67 : vector<8x1xf32> to vector<8x8xf32>
    %69 = arith.mulf %66, %68 : vector<8x8xf32>
    %70 = tpu.concatenate %21, %37, %53, %69 in 1 : vector<8x8xf32>, vector<8x8xf32>, vector<8x8xf32>, vector<8x8xf32> -> vector<8x32xf32>
    %71 = arith.truncf %70 : vector<8x32xf32> to vector<8x32xbf16>
    %c0_19 = arith.constant 0 : index
    %c0_20 = arith.constant 0 : index
    %72 = vector.load %arg11[%c0_19, %c0_20] : memref<8x32xbf16, #tpu.memory_space<vmem>>, vector<8x32xbf16>
    tpu.vector_store %arg11[%c0_19, %c0_20], %71 {strides = array<i32>} : memref<8x32xbf16, #tpu.memory_space<vmem>>, vector<8x32xbf16>,
    %c0_21 = arith.constant 0 : index
    %c0_22 = arith.constant 0 : index
    %73 = vector.load %arg11[%c0_21, %c0_22] : memref<8x32xbf16, #tpu.memory_space<vmem>>, vector<8x32xbf16>
    %c0_23 = arith.constant 0 : index
    %c0_24 = arith.constant 0 : index
    %74 = vector.load %arg7[%c0_23, %c0_24] : memref<32x32xbf16, #tpu.memory_space<vmem>>, vector<32x32xbf16>
    %cst_25 = arith.constant dense<0.000000e+00> : vector<8x32xf32>
    %75 = tpu.matmul %73, %74, %cst_25 {dimension_numbers = #tpu.dot_dimension_numbers<[1], [0], [0], [1], [0, 0, 1, 1], [], []>} : vector<8x32xbf16>, vector<32x32xbf16>, vector<8x32xf32> -> vector<8x32xf32>
    %c0_26 = arith.constant 0 : index
    %c0_27 = arith.constant 0 : index
    %76 = vector.load %arg8[%c0_26, %c0_27] : memref<1x32xf32, #tpu.memory_space<vmem>>, vector<1x32xf32>
    %77 = vector.shape_cast %76 : vector<1x32xf32> to vector<32xf32>
    %78 = vector.shape_cast %77 : vector<32xf32> to vector<1x32xf32>
    %79 = vector.broadcast %78 : vector<1x32xf32> to vector<8x32xf32>
    %80 = arith.addf %75, %79 : vector<8x32xf32>
    %c0_28 = arith.constant 0 : index
    %c0_29 = arith.constant 0 : index
    %c0_30 = arith.constant 0 : index
    %81 = vector.load %arg9[%c0_28, %c0_29, %c0_30] : memref<1x8x32xf32, #tpu.memory_space<vmem>>, vector<1x8x32xf32>
    %82 = vector.shape_cast %81 : vector<1x8x32xf32> to vector<8x32xf32>
    %83 = vector.shape_cast %80 : vector<8x32xf32> to vector<1x8x32xf32>
    tpu.vector_store %arg9[%c0_28, %c0_29, %c0_30], %83 {strides = array<i32>} : memref<1x8x32xf32, #tpu.memory_space<vmem>>, vector<1x8x32xf32>,
    return
  }
  func.func @transform_0(%arg0: i32, %arg1: i32) -> (i32, i32, i32) {
    %c0_i32 = arith.constant 0 : i32
    %c0_i32_0 = arith.constant 0 : i32
    %c0_i32_1 = arith.constant 0 : i32
    return %arg0, %c0_i32, %c0_i32_0 : i32, i32, i32
  }
  func.func @transform_1(%arg0: i32, %arg1: i32) -> (i32, i32) {
    %c0_i32 = arith.constant 0 : i32
    %c0_i32_0 = arith.constant 0 : i32
    %c0_i32_1 = arith.constant 0 : i32
    return %c0_i32, %c0_i32_0 : i32, i32
  }
  func.func @transform_2(%arg0: i32, %arg1: i32) -> (i32, i32) {
    %c0_i32 = arith.constant 0 : i32
    %c0_i32_0 = arith.constant 0 : i32
    %c0_i32_1 = arith.constant 0 : i32
    return %c0_i32, %c0_i32_0 : i32, i32
  }
  func.func @transform_3(%arg0: i32, %arg1: i32) -> (i32, i32) {
    %c0_i32 = arith.constant 0 : i32
    %c0_i32_0 = arith.constant 0 : i32
    %c0_i32_1 = arith.constant 0 : i32
    return %c0_i32, %c0_i32_0 : i32, i32
  }
  func.func @transform_4(%arg0: i32, %arg1: i32) -> (i32, i32) {
    %c0_i32 = arith.constant 0 : i32
    %c0_i32_0 = arith.constant 0 : i32
    %c0_i32_1 = arith.constant 0 : i32
    return %c0_i32, %c0_i32_0 : i32, i32
  }
  func.func @transform_5(%arg0: i32, %arg1: i32) -> (i32, i32) {
    %c0_i32 = arith.constant 0 : i32
    %c0_i32_0 = arith.constant 0 : i32
    %c0_i32_1 = arith.constant 0 : i32
    return %c0_i32, %c0_i32_0 : i32, i32
  }
  func.func @transform_6(%arg0: i32, %arg1: i32) -> (i32, i32) {
    %c0_i32 = arith.constant 0 : i32
    %c0_i32_0 = arith.constant 0 : i32
    %c0_i32_1 = arith.constant 0 : i32
    return %c0_i32, %c0_i32_0 : i32, i32
  }
  func.func @transform_7(%arg0: i32, %arg1: i32) -> (i32, i32, i32) {
    %c0_i32 = arith.constant 0 : i32
    %c0_i32_0 = arith.constant 0 : i32
    return %arg0, %arg1, %c0_i32 : i32, i32, i32
  }
}

module attributes {stable_mosaic.version = 11 : i64} {
  func.func @_self_attention_kernel(%arg0: i32, %arg1: i32, %arg2: memref<1x8x32xf32, #tpu.memory_space<vmem>>, %arg3: memref<1x32xf32, #tpu.memory_space<vmem>>, %arg4: memref<1x32xf32, #tpu.memory_space<vmem>>, %arg5: memref<32x96xbf16, #tpu.memory_space<vmem>>, %arg6: memref<1x96xf32, #tpu.memory_space<vmem>>, %arg7: memref<32x32xbf16, #tpu.memory_space<vmem>>, %arg8: memref<1x32xf32, #tpu.memory_space<vmem>>, %arg9: memref<1x8x32xf32, #tpu.memory_space<vmem>>, %arg10: memref<8x96xbf16, #tpu.memory_space<vmem>>, %arg11: memref<8x32xbf16, #tpu.memory_space<vmem>>) attributes {dimension_semantics = [#tpu.dimension_semantics<parallel>, #tpu.dimension_semantics<arbitrary>], iteration_bounds = array<i64: 2, 1>, scalar_prefetch = 0 : i64, scratch_operands = 2 : i64, tpu.core_type = #tpu.core_type<tc>, window_params = [{transform_indices = @transform_0, window_bounds = array<i64: 1, 8, 32>}, {pipeline_mode = #tpu.pipeline_mode<synchronous>, transform_indices = @transform_1, window_bounds = array<i64: 1, 32>}, {pipeline_mode = #tpu.pipeline_mode<synchronous>, transform_indices = @transform_2, window_bounds = array<i64: 1, 32>}, {pipeline_mode = #tpu.pipeline_mode<synchronous>, transform_indices = @transform_3, window_bounds = array<i64: 32, 96>}, {pipeline_mode = #tpu.pipeline_mode<synchronous>, transform_indices = @transform_4, window_bounds = array<i64: 1, 96>}, {pipeline_mode = #tpu.pipeline_mode<synchronous>, transform_indices = @transform_5, window_bounds = array<i64: 32, 32>}, {pipeline_mode = #tpu.pipeline_mode<synchronous>, transform_indices = @transform_6, window_bounds = array<i64: 1, 32>}, {transform_indices = @transform_7, window_bounds = array<i64: 1, 8, 32>}]} {
    %c0_i32 = arith.constant 0 : i32
    %0 = arith.cmpi eq, %arg1, %c0_i32 : i32
    %1 = arith.extui %0 : i1 to i32
    %c0_i32_0 = arith.constant 0 : i32
    %2 = arith.cmpi ne, %1, %c0_i32_0 : i32
    scf.if %2 {
      %c0_31 = arith.constant 0 : index
      %c0_32 = arith.constant 0 : index
      %c0_33 = arith.constant 0 : index
      %84 = vector.load %arg2[%c0_31, %c0_32, %c0_33] : memref<1x8x32xf32, #tpu.memory_space<vmem>>, vector<1x8x32xf32>
      %85 = vector.shape_cast %84 : vector<1x8x32xf32> to vector<8x32xf32>
      %cst_34 = arith.constant dense<0.000000e+00> : vector<8xf32>
      %86 = vector.multi_reduction <add>, %85, %cst_34 [1] : vector<8x32xf32> to vector<8xf32>
      %87 = vector.shape_cast %86 : vector<8xf32> to vector<8x1xf32>
      %cst_35 = arith.constant 3.200000e+01 : f32
      %88 = vector.broadcast %cst_35 : f32 to vector<8x1xf32>
      %89 = arith.divf %87, %88 : vector<8x1xf32>
      %90 = vector.broadcast %89 : vector<8x1xf32> to vector<8x32xf32>
      %91 = arith.subf %85, %90 : vector<8x32xf32>
      %92 = arith.mulf %91, %91 : vector<8x32xf32>
      %cst_36 = arith.constant dense<0.000000e+00> : vector<8xf32>
      %93 = vector.multi_reduction <add>, %92, %cst_36 [1] : vector<8x32xf32> to vector<8xf32>
      %94 = vector.shape_cast %93 : vector<8xf32> to vector<8x1xf32>
      %cst_37 = arith.constant 3.200000e+01 : f32
      %95 = vector.broadcast %cst_37 : f32 to vector<8x1xf32>
      %96 = arith.divf %94, %95 : vector<8x1xf32>
      %97 = vector.broadcast %89 : vector<8x1xf32> to vector<8x32xf32>
      %98 = arith.subf %85, %97 : vector<8x32xf32>
      %cst_38 = arith.constant 9.99999974E-6 : f32
      %99 = vector.broadcast %cst_38 : f32 to vector<8x1xf32>
      %100 = arith.addf %96, %99 : vector<8x1xf32>
      %101 = math.rsqrt %100 : vector<8x1xf32>
      %102 = vector.broadcast %101 : vector<8x1xf32> to vector<8x32xf32>
      %103 = arith.mulf %98, %102 : vector<8x32xf32>
      %c0_39 = arith.constant 0 : index
      %c0_40 = arith.constant 0 : index
      %104 = vector.load %arg3[%c0_39, %c0_40] : memref<1x32xf32, #tpu.memory_space<vmem>>, vector<1x32xf32>
      %105 = vector.shape_cast %104 : vector<1x32xf32> to vector<32xf32>
      %106 = vector.shape_cast %105 : vector<32xf32> to vector<1x32xf32>
      %107 = vector.broadcast %106 : vector<1x32xf32> to vector<8x32xf32>
      %108 = arith.mulf %103, %107 : vector<8x32xf32>
      %c0_41 = arith.constant 0 : index
      %c0_42 = arith.constant 0 : index
      %109 = vector.load %arg4[%c0_41, %c0_42] : memref<1x32xf32, #tpu.memory_space<vmem>>, vector<1x32xf32>
      %110 = vector.shape_cast %109 : vector<1x32xf32> to vector<32xf32>
      %111 = vector.shape_cast %110 : vector<32xf32> to vector<1x32xf32>
      %112 = vector.broadcast %111 : vector<1x32xf32> to vector<8x32xf32>
      %113 = arith.addf %108, %112 : vector<8x32xf32>
      %114 = arith.truncf %113 : vector<8x32xf32> to vector<8x32xbf16>
      %c0_43 = arith.constant 0 : index
      %c0_44 = arith.constant 0 : index
      %115 = vector.load %arg5[%c0_43, %c0_44] : memref<32x96xbf16, #tpu.memory_space<vmem>>, vector<32x96xbf16>
      %cst_45 = arith.constant dense<0.000000e+00> : vector<8x96xf32>
      %116 = tpu.matmul %114, %115, %cst_45 {dimension_numbers = #tpu.dot_dimension_numbers<[1], [0], [0], [1], [0, 0, 1, 1], [], []>} : vector<8x32xbf16>, vector<32x96xbf16>, vector<8x96xf32> -> vector<8x96xf32>
      %c0_46 = arith.constant 0 : index
      %c0_47 = arith.constant 0 : index
      %117 = vector.load %arg6[%c0_46, %c0_47] : memref<1x96xf32, #tpu.memory_space<vmem>>, vector<1x96xf32>
      %118 = vector.shape_cast %117 : vector<1x96xf32> to vector<96xf32>
      %119 = vector.shape_cast %118 : vector<96xf32> to vector<1x96xf32>
      %120 = vector.broadcast %119 : vector<1x96xf32> to vector<8x96xf32>
      %121 = arith.addf %116, %120 : vector<8x96xf32>
      %122 = arith.truncf %121 : vector<8x96xf32> to vector<8x96xbf16>
      %c0_48 = arith.constant 0 : index
      %c0_49 = arith.constant 0 : index
      %123 = vector.load %arg10[%c0_48, %c0_49] : memref<8x96xbf16, #tpu.memory_space<vmem>>, vector<8x96xbf16>
      tpu.vector_store %arg10[%c0_48, %c0_49], %122 {strides = array<i32>} : memref<8x96xbf16, #tpu.memory_space<vmem>>, vector<8x96xbf16>,
    } else {
    }
    %c0 = arith.constant 0 : index
    %c0_1 = arith.constant 0 : index
    %3 = vector.load %arg10[%c0, %c0_1] : memref<8x96xbf16, #tpu.memory_space<vmem>>, vector<8x32xbf16>
    %c0_2 = arith.constant 0 : index
    %c32 = arith.constant 32 : index
    %4 = vector.load %arg10[%c0_2, %c32] : memref<8x96xbf16, #tpu.memory_space<vmem>>, vector<8x32xbf16>
    %c0_3 = arith.constant 0 : index
    %c64 = arith.constant 64 : index
    %5 = vector.load %arg10[%c0_3, %c64] : memref<8x96xbf16, #tpu.memory_space<vmem>>, vector<8x32xbf16>
    %6 = vector.extract_strided_slice %3 {offsets = [0, 0], sizes = [8, 8], strides = [1, 1]} : vector<8x32xbf16> to vector<8x8xbf16>
    %7 = vector.extract_strided_slice %4 {offsets = [0, 0], sizes = [8, 8], strides = [1, 1]} : vector<8x32xbf16> to vector<8x8xbf16>
    %cst = arith.constant dense<0.000000e+00> : vector<8x8xf32>
    %8 = tpu.matmul %6, %7, %cst {dimension_numbers = #tpu.dot_dimension_numbers<[1], [1], [0], [0], [0, 0, 1, 0], [], []>} : vector<8x8xbf16>, vector<8x8xbf16>, vector<8x8xf32> -> vector<8x8xf32>
    %cst_4 = arith.constant dense<0xFF800000> : vector<8xf32>
    %9 = vector.multi_reduction <maximumf>, %8, %cst_4 [1] : vector<8x8xf32> to vector<8xf32>
    %10 = vector.shape_cast %9 : vector<8xf32> to vector<8x1xf32>
    %11 = vector.broadcast %10 : vector<8x1xf32> to vector<8x8xf32>
    %12 = arith.subf %8, %11 : vector<8x8xf32>
    %13 = math.exp %12 : vector<8x8xf32>
    %cst_5 = arith.constant dense<0.000000e+00> : vector<8xf32>
    %14 = vector.multi_reduction <add>, %13, %cst_5 [1] : vector<8x8xf32> to vector<8xf32>
    %15 = vector.shape_cast %14 : vector<8xf32> to vector<8x1xf32>
    %16 = arith.truncf %13 : vector<8x8xf32> to vector<8x8xbf16>
    %17 = vector.extract_strided_slice %5 {offsets = [0, 0], sizes = [8, 8], strides = [1, 1]} : vector<8x32xbf16> to vector<8x8xbf16>
    %cst_6 = arith.constant dense<0.000000e+00> : vector<8x8xf32>
    %18 = tpu.matmul %16, %17, %cst_6 {dimension_numbers = #tpu.dot_dimension_numbers<[1], [0], [0], [1], [0, 0, 1, 1], [], []>} : vector<8x8xbf16>, vector<8x8xbf16>, vector<8x8xf32> -> vector<8x8xf32>
    %19 = tpu.reciprocal %15 {approx = true} : vector<8x1xf32> -> vector<8x1xf32>
    %20 = vector.broadcast %19 : vector<8x1xf32> to vector<8x8xf32>
    %21 = arith.mulf %18, %20 : vector<8x8xf32>
    %22 = vector.extract_strided_slice %3 {offsets = [0, 8], sizes = [8, 8], strides = [1, 1]} : vector<8x32xbf16> to vector<8x8xbf16>
    %23 = vector.extract_strided_slice %4 {offsets = [0, 8], sizes = [8, 8], strides = [1, 1]} : vector<8x32xbf16> to vector<8x8xbf16>
    %cst_7 = arith.constant dense<0.000000e+00> : vector<8x8xf32>
    %24 = tpu.matmul %22, %23, %cst_7 {dimension_numbers = #tpu.dot_dimension_numbers<[1], [1], [0], [0], [0, 0, 1, 0], [], []>} : vector<8x8xbf16>, vector<8x8xbf16>, vector<8x8xf32> -> vector<8x8xf32>
    %cst_8 = arith.constant dense<0xFF800000> : vector<8xf32>
    %25 = vector.multi_reduction <maximumf>, %24, %cst_8 [1] : vector<8x8xf32> to vector<8xf32>
    %26 = vector.shape_cast %25 : vector<8xf32> to vector<8x1xf32>
    %27 = vector.broadcast %26 : vector<8x1xf32> to vector<8x8xf32>
    %28 = arith.subf %24, %27 : vector<8x8xf32>
    %29 = math.exp %28 : vector<8x8xf32>
    %cst_9 = arith.constant dense<0.000000e+00> : vector<8xf32>
    %30 = vector.multi_reduction <add>, %29, %cst_9 [1] : vector<8x8xf32> to vector<8xf32>
    %31 = vector.shape_cast %30 : vector<8xf32> to vector<8x1xf32>
    %32 = arith.truncf %29 : vector<8x8xf32> to vector<8x8xbf16>
    %33 = vector.extract_strided_slice %5 {offsets = [0, 8], sizes = [8, 8], strides = [1, 1]} : vector<8x32xbf16> to vector<8x8xbf16>
    %cst_10 = arith.constant dense<0.000000e+00> : vector<8x8xf32>
    %34 = tpu.matmul %32, %33, %cst_10 {dimension_numbers = #tpu.dot_dimension_numbers<[1], [0], [0], [1], [0, 0, 1, 1], [], []>} : vector<8x8xbf16>, vector<8x8xbf16>, vector<8x8xf32> -> vector<8x8xf32>
    %35 = tpu.reciprocal %31 {approx = true} : vector<8x1xf32> -> vector<8x1xf32>
    %36 = vector.broadcast %35 : vector<8x1xf32> to vector<8x8xf32>
    %37 = arith.mulf %34, %36 : vector<8x8xf32>
    %38 = vector.extract_strided_slice %3 {offsets = [0, 16], sizes = [8, 8], strides = [1, 1]} : vector<8x32xbf16> to vector<8x8xbf16>
    %39 = vector.extract_strided_slice %4 {offsets = [0, 16], sizes = [8, 8], strides = [1, 1]} : vector<8x32xbf16> to vector<8x8xbf16>
    %cst_11 = arith.constant dense<0.000000e+00> : vector<8x8xf32>
    %40 = tpu.matmul %38, %39, %cst_11 {dimension_numbers = #tpu.dot_dimension_numbers<[1], [1], [0], [0], [0, 0, 1, 0], [], []>} : vector<8x8xbf16>, vector<8x8xbf16>, vector<8x8xf32> -> vector<8x8xf32>
    %cst_12 = arith.constant dense<0xFF800000> : vector<8xf32>
    %41 = vector.multi_reduction <maximumf>, %40, %cst_12 [1] : vector<8x8xf32> to vector<8xf32>
    %42 = vector.shape_cast %41 : vector<8xf32> to vector<8x1xf32>
    %43 = vector.broadcast %42 : vector<8x1xf32> to vector<8x8xf32>
    %44 = arith.subf %40, %43 : vector<8x8xf32>
    %45 = math.exp %44 : vector<8x8xf32>
    %cst_13 = arith.constant dense<0.000000e+00> : vector<8xf32>
    %46 = vector.multi_reduction <add>, %45, %cst_13 [1] : vector<8x8xf32> to vector<8xf32>
    %47 = vector.shape_cast %46 : vector<8xf32> to vector<8x1xf32>
    %48 = arith.truncf %45 : vector<8x8xf32> to vector<8x8xbf16>
    %49 = vector.extract_strided_slice %5 {offsets = [0, 16], sizes = [8, 8], strides = [1, 1]} : vector<8x32xbf16> to vector<8x8xbf16>
    %cst_14 = arith.constant dense<0.000000e+00> : vector<8x8xf32>
    %50 = tpu.matmul %48, %49, %cst_14 {dimension_numbers = #tpu.dot_dimension_numbers<[1], [0], [0], [1], [0, 0, 1, 1], [], []>} : vector<8x8xbf16>, vector<8x8xbf16>, vector<8x8xf32> -> vector<8x8xf32>
    %51 = tpu.reciprocal %47 {approx = true} : vector<8x1xf32> -> vector<8x1xf32>
    %52 = vector.broadcast %51 : vector<8x1xf32> to vector<8x8xf32>
    %53 = arith.mulf %50, %52 : vector<8x8xf32>
    %54 = vector.extract_strided_slice %3 {offsets = [0, 24], sizes = [8, 8], strides = [1, 1]} : vector<8x32xbf16> to vector<8x8xbf16>
    %55 = vector.extract_strided_slice %4 {offsets = [0, 24], sizes = [8, 8], strides = [1, 1]} : vector<8x32xbf16> to vector<8x8xbf16>
    %cst_15 = arith.constant dense<0.000000e+00> : vector<8x8xf32>
    %56 = tpu.matmul %54, %55, %cst_15 {dimension_numbers = #tpu.dot_dimension_numbers<[1], [1], [0], [0], [0, 0, 1, 0], [], []>} : vector<8x8xbf16>, vector<8x8xbf16>, vector<8x8xf32> -> vector<8x8xf32>
    %cst_16 = arith.constant dense<0xFF800000> : vector<8xf32>
    %57 = vector.multi_reduction <maximumf>, %56, %cst_16 [1] : vector<8x8xf32> to vector<8xf32>
    %58 = vector.shape_cast %57 : vector<8xf32> to vector<8x1xf32>
    %59 = vector.broadcast %58 : vector<8x1xf32> to vector<8x8xf32>
    %60 = arith.subf %56, %59 : vector<8x8xf32>
    %61 = math.exp %60 : vector<8x8xf32>
    %cst_17 = arith.constant dense<0.000000e+00> : vector<8xf32>
    %62 = vector.multi_reduction <add>, %61, %cst_17 [1] : vector<8x8xf32> to vector<8xf32>
    %63 = vector.shape_cast %62 : vector<8xf32> to vector<8x1xf32>
    %64 = arith.truncf %61 : vector<8x8xf32> to vector<8x8xbf16>
    %65 = vector.extract_strided_slice %5 {offsets = [0, 24], sizes = [8, 8], strides = [1, 1]} : vector<8x32xbf16> to vector<8x8xbf16>
    %cst_18 = arith.constant dense<0.000000e+00> : vector<8x8xf32>
    %66 = tpu.matmul %64, %65, %cst_18 {dimension_numbers = #tpu.dot_dimension_numbers<[1], [0], [0], [1], [0, 0, 1, 1], [], []>} : vector<8x8xbf16>, vector<8x8xbf16>, vector<8x8xf32> -> vector<8x8xf32>
    %67 = tpu.reciprocal %63 {approx = true} : vector<8x1xf32> -> vector<8x1xf32>
    %68 = vector.broadcast %67 : vector<8x1xf32> to vector<8x8xf32>
    %69 = arith.mulf %66, %68 : vector<8x8xf32>
    %70 = tpu.concatenate %21, %37, %53, %69 in 1 : vector<8x8xf32>, vector<8x8xf32>, vector<8x8xf32>, vector<8x8xf32> -> vector<8x32xf32>
    %71 = arith.truncf %70 : vector<8x32xf32> to vector<8x32xbf16>
    %c0_19 = arith.constant 0 : index
    %c0_20 = arith.constant 0 : index
    %72 = vector.load %arg11[%c0_19, %c0_20] : memref<8x32xbf16, #tpu.memory_space<vmem>>, vector<8x32xbf16>
    tpu.vector_store %arg11[%c0_19, %c0_20], %71 {strides = array<i32>} : memref<8x32xbf16, #tpu.memory_space<vmem>>, vector<8x32xbf16>,
    %c0_21 = arith.constant 0 : index
    %c0_22 = arith.constant 0 : index
    %73 = vector.load %arg11[%c0_21, %c0_22] : memref<8x32xbf16, #tpu.memory_space<vmem>>, vector<8x32xbf16>
    %c0_23 = arith.constant 0 : index
    %c0_24 = arith.constant 0 : index
    %74 = vector.load %arg7[%c0_23, %c0_24] : memref<32x32xbf16, #tpu.memory_space<vmem>>, vector<32x32xbf16>
    %cst_25 = arith.constant dense<0.000000e+00> : vector<8x32xf32>
    %75 = tpu.matmul %73, %74, %cst_25 {dimension_numbers = #tpu.dot_dimension_numbers<[1], [0], [0], [1], [0, 0, 1, 1], [], []>} : vector<8x32xbf16>, vector<32x32xbf16>, vector<8x32xf32> -> vector<8x32xf32>
    %c0_26 = arith.constant 0 : index
    %c0_27 = arith.constant 0 : index
    %76 = vector.load %arg8[%c0_26, %c0_27] : memref<1x32xf32, #tpu.memory_space<vmem>>, vector<1x32xf32>
    %77 = vector.shape_cast %76 : vector<1x32xf32> to vector<32xf32>
    %78 = vector.shape_cast %77 : vector<32xf32> to vector<1x32xf32>
    %79 = vector.broadcast %78 : vector<1x32xf32> to vector<8x32xf32>
    %80 = arith.addf %75, %79 : vector<8x32xf32>
    %c0_28 = arith.constant 0 : index
    %c0_29 = arith.constant 0 : index
    %c0_30 = arith.constant 0 : index
    %81 = vector.load %arg9[%c0_28, %c0_29, %c0_30] : memref<1x8x32xf32, #tpu.memory_space<vmem>>, vector<1x8x32xf32>
    %82 = vector.shape_cast %81 : vector<1x8x32xf32> to vector<8x32xf32>
    %83 = vector.shape_cast %80 : vector<8x32xf32> to vector<1x8x32xf32>
    tpu.vector_store %arg9[%c0_28, %c0_29, %c0_30], %83 {strides = array<i32>} : memref<1x8x32xf32, #tpu.memory_space<vmem>>, vector<1x8x32xf32>,
    return
  }
  func.func @transform_0(%arg0: i32, %arg1: i32) -> (i32, i32, i32) {
    %c0_i32 = arith.constant 0 : i32
    %c0_i32_0 = arith.constant 0 : i32
    %c0_i32_1 = arith.constant 0 : i32
    return %arg0, %c0_i32, %c0_i32_0 : i32, i32, i32
  }
  func.func @transform_1(%arg0: i32, %arg1: i32) -> (i32, i32) {
    %c0_i32 = arith.constant 0 : i32
    %c0_i32_0 = arith.constant 0 : i32
    %c0_i32_1 = arith.constant 0 : i32
    return %c0_i32, %c0_i32_0 : i32, i32
  }
  func.func @transform_2(%arg0: i32, %arg1: i32) -> (i32, i32) {
    %c0_i32 = arith.constant 0 : i32
    %c0_i32_0 = arith.constant 0 : i32
    %c0_i32_1 = arith.constant 0 : i32
    return %c0_i32, %c0_i32_0 : i32, i32
  }
  func.func @transform_3(%arg0: i32, %arg1: i32) -> (i32, i32) {
    %c0_i32 = arith.constant 0 : i32
    %c0_i32_0 = arith.constant 0 : i32
    %c0_i32_1 = arith.constant 0 : i32
    return %c0_i32, %c0_i32_0 : i32, i32
  }
  func.func @transform_4(%arg0: i32, %arg1: i32) -> (i32, i32) {
    %c0_i32 = arith.constant 0 : i32
    %c0_i32_0 = arith.constant 0 : i32
    %c0_i32_1 = arith.constant 0 : i32
    return %c0_i32, %c0_i32_0 : i32, i32
  }
  func.func @transform_5(%arg0: i32, %arg1: i32) -> (i32, i32) {
    %c0_i32 = arith.constant 0 : i32
    %c0_i32_0 = arith.constant 0 : i32
    %c0_i32_1 = arith.constant 0 : i32
    return %c0_i32, %c0_i32_0 : i32, i32
  }
  func.func @transform_6(%arg0: i32, %arg1: i32) -> (i32, i32) {
    %c0_i32 = arith.constant 0 : i32
    %c0_i32_0 = arith.constant 0 : i32
    %c0_i32_1 = arith.constant 0 : i32
    return %c0_i32, %c0_i32_0 : i32, i32
  }
  func.func @transform_7(%arg0: i32, %arg1: i32) -> (i32, i32, i32) {
    %c0_i32 = arith.constant 0 : i32
    %c0_i32_0 = arith.constant 0 : i32
    return %arg0, %arg1, %c0_i32 : i32, i32, i32
  }
}

</mosaic_0001>

<llo_original>
// kernel: tpu_custom_call.1
$region0: #{tpu_custom_call.1}
  #allocation0 [shape = 'u32[]', space=smem, size = 0x4, offset = 0x4, fixed_abs, tag = 'smem constant byte address 0x4 - core index']
  #allocation1 [shape = 'u32[144,128]{1,0:T(1,128)}', space=vmem, size = 0x12000, scoped, tag = 'internal scratch']
  #allocation2 [shape = 'bf16[8,96]{1,0:T(8,128)(2,1)}', space=vmem, size = 0x800, scoped, tag = 'scratch operand']
  #allocation3 [shape = 'bf16[8,32]{1,0:T(8,128)(2,1)}', space=vmem, size = 0x800, scoped, tag = 'scratch operand']
  %s0 = inlined_call_operand.hbm [shape: f32[2,8,32], index: 0, kind: input, shape index: {}]
  %s1 = inlined_call_operand.vmem [shape: f32[1,32], index: 1, kind: input, shape index: {}]
  %s2 = inlined_call_operand.vmem [shape: f32[1,32], index: 2, kind: input, shape index: {}]
  %s3 = inlined_call_operand.hbm [shape: bf16[32,96], index: 3, kind: input, shape index: {}]
  %s4 = inlined_call_operand.hbm [shape: f32[1,96], index: 4, kind: input, shape index: {}]
  %s5 = inlined_call_operand.vmem [shape: bf16[32,32], index: 5, kind: input, shape index: {}]
  %s6 = inlined_call_operand.vmem [shape: f32[1,32], index: 6, kind: input, shape index: {}]
  %s7 = inlined_call_operand.hbm [shape: f32[2,8,32], index: 7, kind: output, shape index: {}]
  %s8 = sld [smem:[#allocation0]]
  $region77: #{tpu_custom_call.1} parent=0
    _
  %s10 = ssub.s32 1, %s8
  %s11 = scalar_select 0, %s10, %s8
  $region1: #{tpu_custom_call.1} parent=0
    #allocation4 [shape = 'u8[8192]{0}', space=vmem, size = 0x2000, scoped, tag = 'input window, operand 0']
    #allocation5 [shape = 's32[2]{0}', space=sflag, size = 0x8, scoped, tag = 'scoped memory for tpu_custom_call.1']
    #allocation6 [shape = 's32[2]{0}', space=sflag, size = 0x8, scoped, tag = 'scoped memory for tpu_custom_call.1']
    #allocation7 [shape = 'u8[8192]{0}', space=vmem, size = 0x2000, scoped, tag = 'input window, operand 3, single buffered']
    #allocation8 [shape = 's32[1]{0}', space=sflag, size = 0x4, scoped, tag = 'scoped memory for tpu_custom_call.1']
    #allocation9 [shape = 'u8[512]{0}', space=vmem, size = 0x400, scoped, tag = 'input window, operand 4, single buffered']
    #allocation10 [shape = 'u8[8192]{0}', space=vmem, size = 0x2000, scoped, tag = 'output window, operand 0']
    %12 = vsyncpa [#allocation5], 0
    %s13 = scalar_lea.sflag [#allocation5], 1
    %14 = vsyncpa %s13, 0
    %15 = vsyncpa [#allocation8], 0
    %16 = vsyncpa [#allocation6], 0
    %s17 = scalar_lea.sflag [#allocation6], 1
    %18 = vsyncpa %s17, 0
    loop: start=0, step=1, limit=4
    $region2: #{tpu_custom_call.1} parent=1 // loop_pre_header
      _
    $region3: #{tpu_custom_call.1} parent=1 // loop_header
      %s20 = sphi 0, %s24
      %p21 = scmp.ge.s32.totalorder %s20, 4
      %s27 = sphi 0, %s39
      %s28 = sphi 0, %s35
      %s29 = sphi 0, %s27
      %s30 = sphi 0, %s28
      %s31 = sphi 0, %s29
      %s32 = sphi 0, %s30
      %s42 = sphi 0, %s44
      %s45 = sphi 0, %s42
      %s46 = sphi 0, %s45
      %s62 = sphi 0, %s46
      %s66 = sphi 0, %s66
      %s68 = sphi 0, %s66
      %s69 = sphi 0, %s68
      %s83 = sphi 0, %s69
      %s87 = sphi 0, %s87
      %s89 = sphi 0, %s87
      %s90 = sphi 0, %s89
      %s104 = sphi 0, %s90
      %s108 = sphi 0, %s108
      %s110 = sphi 0, %s108
      %s111 = sphi 0, %s110
      %s125 = sphi 0, %s111
      %s129 = sphi 0, %s129
      %s131 = sphi 0, %s129
      %s132 = sphi 0, %s131
      %s146 = sphi 0, %s132
      %s150 = sphi 0, %s150
      %s152 = sphi 0, %s150
      %s153 = sphi 0, %s152
      %s167 = sphi 0, %s153
      %s171 = sphi 0, %s171
      %s173 = sphi 0, %s171
      %s174 = sphi 0, %s173
      %s188 = sphi 0, %s174
      %s196 = sphi 0, %s198
      %s199 = sphi 0, %s196
      %s200 = sphi 0, %s199
      %s216 = sphi 0, %s200
    $region4: #{tpu_custom_call.1} parent=1 // loop_header_branch
      %23 = sbr.rel (%p21) target = $region8
    $region5: #{tpu_custom_call.1} parent=1 // loop_body
      %s25 = ssub.s32 %s20, 1
      %s26 = ssub.s32 %s20, 2
      %s33 = sadd.s32 1, %s28
      %p34 = scmp.ge.s32.totalorder %s33, 1
      %s35 = scalar_select %p34, 0, %s33
      %s36 = sadd.s32 1, %s27
      %s37 = scalar_select %p34, %s36, %s27
      %p38 = scmp.ge.s32.totalorder %s37, 2
      %s39 = scalar_select %p38, 0, %s37
      %s40 = ssub.s32 %s27, %s39
      %p41 = scmp.eq.s32.totalorder %s40, 0
      %s43 = sadd.s32 %s42, 1
      %s44 = scalar_select %p41, %s42, %s43
      %p47 = pneg %p41
      %p48 = scmp.eq.s32.totalorder %s20, 1
      %p49 = por %p47, %p48
      %p50 = scmp.ne.s32.totalorder %s42, %s45
      %p51 = scmp.eq.s32.totalorder %s20, 0
      %p52 = por %p50, %p51
      %p53 = scmp.ne.s32.totalorder %s42, %s45
      %p54 = scmp.eq.s32.totalorder %s25, 1
      %p55 = por %p53, %p54
      %p56 = scmp.ne.s32.totalorder %s45, %s46
      %p57 = scmp.eq.s32.totalorder %s25, 0
      %p58 = por %p56, %p57
      %p59 = scmp.ne.s32.totalorder %s45, %s46
      %p60 = scmp.eq.s32.totalorder %s26, 1
      %p61 = por %p59, %p60
      %p63 = scmp.ne.s32.totalorder %s46, %s62
      %p64 = scmp.eq.s32.totalorder %s26, 0
      %p65 = por %p63, %p64
      %s67 = sadd.s32 %s66, 1
      %p70 = scmp.eq.s32.totalorder %s20, 1
      %p71 = scmp.ne.s32.totalorder %s66, %s68
      %p72 = scmp.eq.s32.totalorder %s20, 0
      %p73 = por %p71, %p72
      %p74 = scmp.ne.s32.totalorder %s66, %s68
      %p75 = scmp.eq.s32.totalorder %s25, 1
      %p76 = por %p74, %p75
      %p77 = scmp.ne.s32.totalorder %s68, %s69
      %p78 = scmp.eq.s32.totalorder %s25, 0
      %p79 = por %p77, %p78
      %p80 = scmp.ne.s32.totalorder %s68, %s69
      %p81 = scmp.eq.s32.totalorder %s26, 1
      %p82 = por %p80, %p81
      %p84 = scmp.ne.s32.totalorder %s69, %s83
      %p85 = scmp.eq.s32.totalorder %s26, 0
      %p86 = por %p84, %p85
      %s88 = sadd.s32 %s87, 1
      %p91 = scmp.eq.s32.totalorder %s20, 1
      %p92 = scmp.ne.s32.totalorder %s87, %s89
      %p93 = scmp.eq.s32.totalorder %s20, 0
      %p94 = por %p92, %p93
      %p95 = scmp.ne.s32.totalorder %s87, %s89
      %p96 = scmp.eq.s32.totalorder %s25, 1
      %p97 = por %p95, %p96
      %p98 = scmp.ne.s32.totalorder %s89, %s90
      %p99 = scmp.eq.s32.totalorder %s25, 0
      %p100 = por %p98, %p99
      %p101 = scmp.ne.s32.totalorder %s89, %s90
      %p102 = scmp.eq.s32.totalorder %s26, 1
      %p103 = por %p101, %p102
      %p105 = scmp.ne.s32.totalorder %s90, %s104
      %p106 = scmp.eq.s32.totalorder %s26, 0
      %p107 = por %p105, %p106
      %s109 = sadd.s32 %s108, 1
      %p112 = scmp.eq.s32.totalorder %s20, 1
      %p113 = scmp.ne.s32.totalorder %s108, %s110
      %p114 = scmp.eq.s32.totalorder %s20, 0
      %p115 = por %p113, %p114
      %p116 = scmp.ne.s32.totalorder %s108, %s110
      %p117 = scmp.eq.s32.totalorder %s25, 1
      %p118 = por %p116, %p117
      %p119 = scmp.ne.s32.totalorder %s110, %s111
      %p120 = scmp.eq.s32.totalorder %s25, 0
      %p121 = por %p119, %p120
      %p122 = scmp.ne.s32.totalorder %s110, %s111
      %p123 = scmp.eq.s32.totalorder %s26, 1
      %p124 = por %p122, %p123
      %p126 = scmp.ne.s32.totalorder %s111, %s125
      %p127 = scmp.eq.s32.totalorder %s26, 0
      %p128 = por %p126, %p127
      %s130 = sadd.s32 %s129, 1
      %p133 = scmp.eq.s32.totalorder %s20, 1
      %p134 = scmp.ne.s32.totalorder %s129, %s131
      %p135 = scmp.eq.s32.totalorder %s20, 0
      %p136 = por %p134, %p135
      %p137 = scmp.ne.s32.totalorder %s129, %s131
      %p138 = scmp.eq.s32.totalorder %s25, 1
      %p139 = por %p137, %p138
      %p140 = scmp.ne.s32.totalorder %s131, %s132
      %p141 = scmp.eq.s32.totalorder %s25, 0
      %p142 = por %p140, %p141
      %p143 = scmp.ne.s32.totalorder %s131, %s132
      %p144 = scmp.eq.s32.totalorder %s26, 1
      %p145 = por %p143, %p144
      %p147 = scmp.ne.s32.totalorder %s132, %s146
      %p148 = scmp.eq.s32.totalorder %s26, 0
      %p149 = por %p147, %p148
      %s151 = sadd.s32 %s150, 1
      %p154 = scmp.eq.s32.totalorder %s20, 1
      %p155 = scmp.ne.s32.totalorder %s150, %s152
      %p156 = scmp.eq.s32.totalorder %s20, 0
      %p157 = por %p155, %p156
      %p158 = scmp.ne.s32.totalorder %s150, %s152
      %p159 = scmp.eq.s32.totalorder %s25, 1
      %p160 = por %p158, %p159
      %p161 = scmp.ne.s32.totalorder %s152, %s153
      %p162 = scmp.eq.s32.totalorder %s25, 0
      %p163 = por %p161, %p162
      %p164 = scmp.ne.s32.totalorder %s152, %s153
      %p165 = scmp.eq.s32.totalorder %s26, 1
      %p166 = por %p164, %p165
      %p168 = scmp.ne.s32.totalorder %s153, %s167
      %p169 = scmp.eq.s32.totalorder %s26, 0
      %p170 = por %p168, %p169
      %s172 = sadd.s32 %s171, 1
      %p175 = scmp.eq.s32.totalorder %s20, 1
      %p176 = scmp.ne.s32.totalorder %s171, %s173
      %p177 = scmp.eq.s32.totalorder %s20, 0
      %p178 = por %p176, %p177
      %p179 = scmp.ne.s32.totalorder %s171, %s173
      %p180 = scmp.eq.s32.totalorder %s25, 1
      %p181 = por %p179, %p180
      %p182 = scmp.ne.s32.totalorder %s173, %s174
      %p183 = scmp.eq.s32.totalorder %s25, 0
      %p184 = por %p182, %p183
      %p185 = scmp.ne.s32.totalorder %s173, %s174
      %p186 = scmp.eq.s32.totalorder %s26, 1
      %p187 = por %p185, %p186
      %p189 = scmp.ne.s32.totalorder %s174, %s188
      %p190 = scmp.eq.s32.totalorder %s26, 0
      %p191 = por %p189, %p190
      %s192 = ssub.s32 %s27, %s39
      %s193 = ssub.s32 %s28, %s35
      %s194 = sor.u32 %s192, %s193
      %p195 = scmp.eq.s32.totalorder %s194, 0
      %s197 = sadd.s32 %s196, 1
      %s198 = scalar_select %p195, %s196, %s197
      %p201 = pneg %p195
      %p202 = scmp.eq.s32.totalorder %s20, 1
      %p203 = por %p201, %p202
      %p204 = scmp.ne.s32.totalorder %s196, %s199
      %p205 = scmp.eq.s32.totalorder %s20, 0
      %p206 = por %p204, %p205
      %p207 = scmp.ne.s32.totalorder %s196, %s199
      %p208 = scmp.eq.s32.totalorder %s25, 1
      %p209 = por %p207, %p208
      %p210 = scmp.ne.s32.totalorder %s199, %s200
      %p211 = scmp.eq.s32.totalorder %s25, 0
      %p212 = por %p210, %p211
      %p213 = scmp.ne.s32.totalorder %s199, %s200
      %p214 = scmp.eq.s32.totalorder %s26, 1
      %p215 = por %p213, %p214
      %p217 = scmp.ne.s32.totalorder %s200, %s216
      %p218 = scmp.eq.s32.totalorder %s26, 0
      %p219 = por %p217, %p218
      %p220 = scmp.le.s32.totalorder 1, %s20
      %p221 = scmp.lt.s32.totalorder %s20, 3
      %p222 = pnand %p220, %p221
      %p223 = pneg %p222
      // Predicated region
      $region9: #{tpu_custom_call.1} parent=5 // pred_check
        _
      $region10: #{tpu_custom_call.1} parent=5 // pred_check_branch
        %225 = sbr.rel (%p222) target = $region12
      $region11: #{tpu_custom_call.1} parent=5 // pred_region
        %s226 = ssub.s32 %s20, 1
        // Predicated region
        $region13: #{tpu_custom_call.1} parent=11 // pred_check
          %p227 = pneg %p79
        $region14: #{tpu_custom_call.1} parent=11 // pred_check_branch
          %229 = sbr.rel (%p227) target = $region16
        $region15: #{tpu_custom_call.1} parent=11 // pred_region
          _
        $region16: #{tpu_custom_call.1} parent=11 // pred_fallthru
          _
        // Predicated region
        $region17: #{tpu_custom_call.1} parent=11 // pred_check
          %p230 = pneg %p100
        $region18: #{tpu_custom_call.1} parent=11 // pred_check_branch
          %232 = sbr.rel (%p230) target = $region20
        $region19: #{tpu_custom_call.1} parent=11 // pred_region
          _
        $region20: #{tpu_custom_call.1} parent=11 // pred_fallthru
          _
        // Predicated region
        $region21: #{tpu_custom_call.1} parent=11 // pred_check
          %p233 = pneg %p121
        $region22: #{tpu_custom_call.1} parent=11 // pred_check_branch
          %235 = sbr.rel (%p233) target = $region24
        $region23: #{tpu_custom_call.1} parent=11 // pred_region
          %s237 = ssub.s32 256, 256
          %238 = vsyncadd [#allocation8], %s237
          %s239 = sshll.u32 [#allocation7], 4
          %s240 = int_to_ptr.vmem [resolvable:$true] %s239
          %245 = dma.hbm_to_vmem [thread:$0]  %s3, 256, %s240, [#allocation8], 64, 64, 4
        $region24: #{tpu_custom_call.1} parent=11 // pred_fallthru
          _
        // Predicated region
        $region25: #{tpu_custom_call.1} parent=11 // pred_check
          %p246 = pneg %p142
        $region26: #{tpu_custom_call.1} parent=11 // pred_check_branch
          %248 = sbr.rel (%p246) target = $region28
        $region27: #{tpu_custom_call.1} parent=11 // pred_region
          %s250 = ssub.s32 16, 16
          %251 = vsyncadd [#allocation8], %s250
          %s253 = sshll.u32 [#allocation9], 4
          %s254 = int_to_ptr.vmem [resolvable:$true] %s253
          %256 = dma.hbm_to_vmem [thread:$0]  %s4, 16, %s254, [#allocation8]
        $region28: #{tpu_custom_call.1} parent=11 // pred_fallthru
          _
        // Predicated region
        $region29: #{tpu_custom_call.1} parent=11 // pred_check
          %p257 = pneg %p163
        $region30: #{tpu_custom_call.1} parent=11 // pred_check_branch
          %259 = sbr.rel (%p257) target = $region32
        $region31: #{tpu_custom_call.1} parent=11 // pred_region
          _
        $region32: #{tpu_custom_call.1} parent=11 // pred_fallthru
          _
        // Predicated region
        $region33: #{tpu_custom_call.1} parent=11 // pred_check
          %p260 = pneg %p184
        $region34: #{tpu_custom_call.1} parent=11 // pred_check_branch
          %262 = sbr.rel (%p260) target = $region36
        $region35: #{tpu_custom_call.1} parent=11 // pred_region
          _
        $region36: #{tpu_custom_call.1} parent=11 // pred_fallthru
          _
      $region12: #{tpu_custom_call.1} parent=5 // pred_fallthru
        _
      %p263 = scmp.lt.s32.totalorder %s20, 2
      // Predicated region
      $region37: #{tpu_custom_call.1} parent=5 // pred_check
        %p264 = pneg %p263
      $region38: #{tpu_custom_call.1} parent=5 // pred_check_branch
        %266 = sbr.rel (%p264) target = $region40
      $region39: #{tpu_custom_call.1} parent=5 // pred_region
        // Predicated region
        $region41: #{tpu_custom_call.1} parent=39 // pred_check
          %p267 = pneg %p52
        $region42: #{tpu_custom_call.1} parent=39 // pred_check_branch
          %269 = sbr.rel (%p267) target = $region44
        $region43: #{tpu_custom_call.1} parent=39 // pred_region
          %s270 = sand.u32 %s42, 1
          %s271 = scalar_lea.sflag [#allocation5], %s270
          %s272 = sand.u32 %s42, 1
          %s273 = smul.addr %s272, 8
          %s274 = scalar_lea.vmem [#allocation4], %s273
          %s276 = ssub.s32 128, 128
          %277 = vsyncadd %s271, %s276
          %s278 = smul.addr %s27, 128
          %s279 = scalar_lea.hbm %s0, %s278
          %s281 = sshll.u32 %s274, 4
          %s282 = int_to_ptr.vmem [resolvable:$true] %s281
          %284 = dma.hbm_to_vmem [thread:$0]  %s279, 128, %s282, %s271
        $region44: #{tpu_custom_call.1} parent=39 // pred_fallthru
          _
      $region40: #{tpu_custom_call.1} parent=5 // pred_fallthru
        _
      %p285 = scmp.le.s32.totalorder 1, %s20
      %p286 = scmp.lt.s32.totalorder %s20, 3
      %p287 = pnand %p285, %p286
      %p288 = pneg %p287
      // Predicated region
      $region45: #{tpu_custom_call.1} parent=5 // pred_check
        _
      $region46: #{tpu_custom_call.1} parent=5 // pred_check_branch
        %290 = sbr.rel (%p287) target = $region48
      $region47: #{tpu_custom_call.1} parent=5 // pred_region
        %s291 = ssub.s32 %s20, 1
        %s292 = sand.u32 %s45, 1
        %s293 = scalar_lea.sflag [#allocation5], %s292
        %s294 = sand.u32 %s45, 1
        %s295 = smul.addr %s294, 8
        %s296 = scalar_lea.vmem [#allocation4], %s295
        // Predicated region
        $region49: #{tpu_custom_call.1} parent=47 // pred_check
          %p297 = pneg %p58
        $region50: #{tpu_custom_call.1} parent=47 // pred_check_branch
          %299 = sbr.rel (%p297) target = $region52
        $region51: #{tpu_custom_call.1} parent=47 // pred_region
          %300 = dma.done %s293, 128
        $region52: #{tpu_custom_call.1} parent=47 // pred_fallthru
          _
        // Predicated region
        $region53: #{tpu_custom_call.1} parent=47 // pred_check
          %p301 = pneg %p121
        $region54: #{tpu_custom_call.1} parent=47 // pred_check_branch
          %303 = sbr.rel (%p301) target = $region56
        $region55: #{tpu_custom_call.1} parent=47 // pred_region
          %304 = dma.done [#allocation8], 256
        $region56: #{tpu_custom_call.1} parent=47 // pred_fallthru
          _
        // Predicated region
        $region57: #{tpu_custom_call.1} parent=47 // pred_check
          %p305 = pneg %p142
        $region58: #{tpu_custom_call.1} parent=47 // pred_check_branch
          %307 = sbr.rel (%p305) target = $region60
        $region59: #{tpu_custom_call.1} parent=47 // pred_region
          %308 = dma.done [#allocation8], 16
        $region60: #{tpu_custom_call.1} parent=47 // pred_fallthru
          _
        %s309 = sand.u32 %s45, 1
        %s310 = scalar_lea.sflag [#allocation5], %s309
        %s311 = sand.u32 %s45, 1
        %s312 = smul.addr %s311, 8
        %s313 = scalar_lea.vmem [#allocation4], %s312
        %p314 = pneg %p58
        %p315 = pneg %p55
        %p316 = pneg %p79
        %p317 = pneg %p76
        %p318 = pneg %p100
        %p319 = pneg %p97
        %p320 = pneg %p121
        %p321 = pneg %p118
        %p322 = pneg %p142
        %p323 = pneg %p139
        %p324 = pneg %p163
        %p325 = pneg %p160
        %p326 = pneg %p184
        %p327 = pneg %p181
        %p328 = pneg %p212
        %p329 = pneg %p209
        %s330 = sand.u32 %s199, 1
        %s331 = scalar_lea.sflag [#allocation6], %s330
        %s332 = sand.u32 %s199, 1
        %s333 = smul.addr %s332, 8
        %s334 = scalar_lea.vmem [#allocation10], %s333
        %p336 = scmp.eq.s32.totalorder %s30, 0
        // Predicated region
        $region61: #{tpu_custom_call.1} parent=47 // pred_check
          %p337 = pneg %p336
        $region62: #{tpu_custom_call.1} parent=47 // pred_check_branch
          %339 = sbr.rel (%p337) target = $region64
        $region63: #{tpu_custom_call.1} parent=47 // pred_region
          %v340 = vld [vmem:[%s296] sm:$0xff]
          %vm341 = vcmask 261120
          %v342 = vsel %vm341, %v340, 0.0
          %343 = vadd.xlane.f32.xlu0 %v342
          %v344 = vpop.xlane.xlu0 %343
          %v345 = vrcp.pop 32.0
          %v346 = vmul.f32 %v344, %v345
          %v347 = vsub.f32 %v340, %v346
          %v348 = vmul.f32 %v347, %v347
          %v349 = vsel %vm341, %v348, 0.0
          %350 = vadd.xlane.f32.xlu0 %v349
          %v351 = vpop.xlane.xlu0 %350
          %v352 = vmul.f32 %v351, %v345
          %v353 = vadd.f32 %v352, 1e-05
          %v354 = vrsqrt.pop %v353
          %v355 = vmul.f32 %v347, %v354
          %v356 = vld [vmem:[%s1] sm:$0x1]
          %v358 = vlaneseq
          %v359 = vshrl.u32 %v358, 7
          %v360 = vsub.s32 0, %v359
          %v361 = vrot.slane %v356, %v360
          %v363 = vmul.f32 %v355, %v361
          %v364 = vld [vmem:[%s2] sm:$0x1]
          %v366 = vlaneseq
          %v367 = vshrl.u32 %v366, 7
          %v368 = vsub.s32 0, %v367
          %v369 = vrot.slane %v364, %v368
          %v371 = vadd.f32 %v363, %v369
          %v372 = vpack.c.bf16 %v371, %v371
          %v373 = vld [vmem:[#allocation7] sm:$0xf]
          %v374 = vld [vmem:[#allocation7 + $0x4] sm:$0xf]
          %v375 = vld [vmem:[#allocation7 + $0x8] sm:$0xf]
          %v376 = vld [vmem:[#allocation7 + $0xc] sm:$0xf]
          %v377 = vld [vmem:[#allocation9] sm:$0x1]
          %v379 = vlaneseq
          %v380 = vshrl.u32 %v379, 7
          %v381 = vsub.s32 0, %v380
          %v382 = vrot.slane %v377, %v381
          %v388 = vunpack.c.l.b16 %v373
          %v389 = vunpack.c.l.b16 %v374
          %v390 = vunpack.c.l.b16 %v375
          %v391 = vunpack.c.l.b16 %v376
          %v392 = vpack.c.b16 %v389, %v388
          %v393 = vpack.c.b16 %v391, %v390
          %v397 = vsel %vm341, %v372, 0
          %399 = vmatprep.subr.bf16.mxu0 0
          %400 = vmatpush1.bf16.msra.mxu0 %v392
          %401 = vmatprep.subr.bf16.mxu0 0
          %402 = vmatpush1.bf16.msra.mxu0 %v393
          %403 = vmatprep.subr.bf16.mxu0 0
          %404 = vmatpush1.bf16.msra.mxu0 0
          %405 = vmatprep.subr.bf16.mxu0 0
          %406 = vmatpush1.bf16.msra.mxu0 0
          %407 = vmatprep.subr.bf16.mxu0 0
          %408 = vmatpush1.bf16.msra.mxu0 0
          %409 = vmatprep.subr.bf16.mxu0 0
          %410 = vmatpush1.bf16.msra.mxu0 0
          %411 = vmatprep.subr.bf16.mxu0 0
          %412 = vmatpush1.bf16.msra.mxu0 0
          %413 = vmatprep.subr.bf16.mxu0 0
          %414 = vmatpush1.bf16.msra.mxu0 0
          %415 = vmatprep.subr.bf16.mxu0 0
          %416 = vmatpush1.bf16.msra.mxu0 0
          %417 = vmatprep.subr.bf16.mxu0 0
          %418 = vmatpush1.bf16.msra.mxu0 0
          %419 = vmatprep.subr.bf16.mxu0 0
          %420 = vmatpush1.bf16.msra.mxu0 0
          %421 = vmatprep.subr.bf16.mxu0 0
          %422 = vmatpush1.bf16.msra.mxu0 0
          %423 = vmatprep.subr.bf16.mxu0 0
          %424 = vmatpush1.bf16.msra.mxu0 0
          %425 = vmatprep.subr.bf16.mxu0 0
          %426 = vmatpush1.bf16.msra.mxu0 0
          %427 = vmatprep.subr.bf16.mxu0 0
          %428 = vmatpush1.bf16.msra.mxu0 0
          %429 = vmatprep.subr.bf16.mxu0 0
          %430 = vmatpush1.bf16.msra.mxu0 0
          %431 = vmatprep.mubr.bf16.mxu0 0
          %432 = vmatmul.mubr.bf16.gmra.mrb[0].mxu0 %v397
          %v433 = vpop.f32.mrb[0].mxu0
          %v434 = vadd.f32 %v382, %v433
          %v435 = vpop.f32.mrb[0].mxu0
          %v436 = vpop.f32.mrb[0].mxu0
          %v437 = vpop.f32.mrb[0].mxu0
          %438 = vdwg.mxu0
          %v439 = vpack.c.bf16 %v434, %v434
          %vm440 = vcmask 781312
          %441 = vst.msk [vmem:[#allocation2] sm:$0xf] %vm440, %v439
        $region64: #{tpu_custom_call.1} parent=47 // pred_fallthru
          _
        %v442 = vld [vmem:[#allocation2] sm:$0xf]
        %v444 = vunpack.c.l.b16 %v442
        %v445 = vpack.c.b16 %v444, %v444
        %446 = vrot.lane.b32.xlu0 %v445, 96
        %v447 = vpop.permute.xlu0 %446
        %vm448 = vcmask 64512
        %v450 = vsel %vm448, %v442, 0
        %v453 = vsel %vm448, %v447, 0
        %455 = vmatprep.subr.bf16.mxu0 0
        %456 = vmatpush1.bf16.xpose.msra.mxu0 %v453
        %457 = vmatprep.subr.bf16.mxu0 0
        %458 = vmatpush1.bf16.xpose.msra.mxu0 0
        %459 = vmatprep.subr.bf16.mxu0 0
        %460 = vmatpush1.bf16.xpose.msra.mxu0 0
        %461 = vmatprep.subr.bf16.mxu0 0
        %462 = vmatpush1.bf16.xpose.msra.mxu0 0
        %463 = vmatprep.subr.bf16.mxu0 0
        %464 = vmatpush1.bf16.xpose.msra.mxu0 0
        %465 = vmatprep.subr.bf16.mxu0 0
        %466 = vmatpush1.bf16.xpose.msra.mxu0 0
        %467 = vmatprep.subr.bf16.mxu0 0
        %468 = vmatpush1.bf16.xpose.msra.mxu0 0
        %469 = vmatprep.subr.bf16.mxu0 0
        %470 = vmatpush1.bf16.xpose.msra.mxu0 0
        %471 = vmatprep.subr.bf16.mxu0 0
        %472 = vmatpush1.bf16.xpose.msra.mxu0 0
        %473 = vmatprep.subr.bf16.mxu0 0
        %474 = vmatpush1.bf16.xpose.msra.mxu0 0
        %475 = vmatprep.subr.bf16.mxu0 0
        %476 = vmatpush1.bf16.xpose.msra.mxu0 0
        %477 = vmatprep.subr.bf16.mxu0 0
        %478 = vmatpush1.bf16.xpose.msra.mxu0 0
        %479 = vmatprep.subr.bf16.mxu0 0
        %480 = vmatpush1.bf16.xpose.msra.mxu0 0
        %481 = vmatprep.subr.bf16.mxu0 0
        %482 = vmatpush1.bf16.xpose.msra.mxu0 0
        %483 = vmatprep.subr.bf16.mxu0 0
        %484 = vmatpush1.bf16.xpose.msra.mxu0 0
        %485 = vmatprep.subr.bf16.mxu0 0
        %486 = vmatpush1.bf16.xpose.msra.mxu0 0
        %487 = vmatprep.mubr.bf16.mxu0 0
        %488 = vmatmul.mubr.bf16.gmra.mrb[0].mxu0 %v450
        %v489 = vpop.f32.mrb[0].mxu0
        %v490 = vadd.f32 0.0, %v489
        %v491 = vpop.f32.mrb[0].mxu0
        %v492 = vpop.f32.mrb[0].mxu0
        %v493 = vpop.f32.mrb[0].mxu0
        %494 = vdwg.mxu0
        %v495 = vsel %vm448, %v490, -inf
        %496 = vmax.xlane.f32.xlu0 %v495
        %v497 = vpop.xlane.xlu0 %496
        %v498 = vsub.f32 %v490, %v497
        %v499 = vmul.f32 %v498, 1.442695
        %v500 = vpow.pop %v499
        %v501 = vsel %vm448, %v500, 0.0
        %502 = vadd.xlane.f32.xlu0 %v501
        %v503 = vpop.xlane.xlu0 %502
        %v504 = vpack.c.bf16 %v500, %v500
        %505 = vrot.lane.b32.xlu0 %v445, 64
        %v506 = vpop.permute.xlu0 %505
        %v508 = vsel %vm448, %v504, 0
        %vm510 = vcmask 1043456
        %v512 = vsel %vm510, %v506, 0
        %514 = vmatprep.subr.bf16.mxu0 0
        %515 = vmatpush1.bf16.msra.mxu0 %v512
        %516 = vmatprep.subr.bf16.mxu0 0
        %517 = vmatpush1.bf16.msra.mxu0 0
        %518 = vmatprep.subr.bf16.mxu0 0
        %519 = vmatpush1.bf16.msra.mxu0 0
        %520 = vmatprep.subr.bf16.mxu0 0
        %521 = vmatpush1.bf16.msra.mxu0 0
        %522 = vmatprep.subr.bf16.mxu0 0
        %523 = vmatpush1.bf16.msra.mxu0 0
        %524 = vmatprep.subr.bf16.mxu0 0
        %525 = vmatpush1.bf16.msra.mxu0 0
        %526 = vmatprep.subr.bf16.mxu0 0
        %527 = vmatpush1.bf16.msra.mxu0 0
        %528 = vmatprep.subr.bf16.mxu0 0
        %529 = vmatpush1.bf16.msra.mxu0 0
        %530 = vmatprep.subr.bf16.mxu0 0
        %531 = vmatpush1.bf16.msra.mxu0 0
        %532 = vmatprep.subr.bf16.mxu0 0
        %533 = vmatpush1.bf16.msra.mxu0 0
        %534 = vmatprep.subr.bf16.mxu0 0
        %535 = vmatpush1.bf16.msra.mxu0 0
        %536 = vmatprep.subr.bf16.mxu0 0
        %537 = vmatpush1.bf16.msra.mxu0 0
        %538 = vmatprep.subr.bf16.mxu0 0
        %539 = vmatpush1.bf16.msra.mxu0 0
        %540 = vmatprep.subr.bf16.mxu0 0
        %541 = vmatpush1.bf16.msra.mxu0 0
        %542 = vmatprep.subr.bf16.mxu0 0
        %543 = vmatpush1.bf16.msra.mxu0 0
        %544 = vmatprep.subr.bf16.mxu0 0
        %545 = vmatpush1.bf16.msra.mxu0 0
        %546 = vmatprep.mubr.bf16.mxu0 0
        %547 = vmatmul.mubr.bf16.gmra.mrb[0].mxu0 %v508
        %v548 = vpop.f32.mrb[0].mxu0
        %v549 = vadd.f32 0.0, %v548
        %v550 = vpop.f32.mrb[0].mxu0
        %v551 = vpop.f32.mrb[0].mxu0
        %v552 = vpop.f32.mrb[0].mxu0
        %553 = vdwg.mxu0
        %v554 = vrcp.pop %v503
        %v555 = vmul.f32 %v549, %v554
        %556 = vrot.lane.b32.xlu0 %v445, 120
        %v557 = vpop.permute.xlu0 %556
        %558 = vrot.lane.b32.xlu0 %v445, 88
        %v559 = vpop.permute.xlu0 %558
        %v561 = vsel %vm448, %v557, 0
        %v564 = vsel %vm448, %v559, 0
        %566 = vmatprep.subr.bf16.mxu0 0
        %567 = vmatpush1.bf16.xpose.msra.mxu0 %v564
        %568 = vmatprep.subr.bf16.mxu0 0
        %569 = vmatpush1.bf16.xpose.msra.mxu0 0
        %570 = vmatprep.subr.bf16.mxu0 0
        %571 = vmatpush1.bf16.xpose.msra.mxu0 0
        %572 = vmatprep.subr.bf16.mxu0 0
        %573 = vmatpush1.bf16.xpose.msra.mxu0 0
        %574 = vmatprep.subr.bf16.mxu0 0
        %575 = vmatpush1.bf16.xpose.msra.mxu0 0
        %576 = vmatprep.subr.bf16.mxu0 0
        %577 = vmatpush1.bf16.xpose.msra.mxu0 0
        %578 = vmatprep.subr.bf16.mxu0 0
        %579 = vmatpush1.bf16.xpose.msra.mxu0 0
        %580 = vmatprep.subr.bf16.mxu0 0
        %581 = vmatpush1.bf16.xpose.msra.mxu0 0
        %582 = vmatprep.subr.bf16.mxu0 0
        %583 = vmatpush1.bf16.xpose.msra.mxu0 0
        %584 = vmatprep.subr.bf16.mxu0 0
        %585 = vmatpush1.bf16.xpose.msra.mxu0 0
        %586 = vmatprep.subr.bf16.mxu0 0
        %587 = vmatpush1.bf16.xpose.msra.mxu0 0
        %588 = vmatprep.subr.bf16.mxu0 0
        %589 = vmatpush1.bf16.xpose.msra.mxu0 0
        %590 = vmatprep.subr.bf16.mxu0 0
        %591 = vmatpush1.bf16.xpose.msra.mxu0 0
        %592 = vmatprep.subr.bf16.mxu0 0
        %593 = vmatpush1.bf16.xpose.msra.mxu0 0
        %594 = vmatprep.subr.bf16.mxu0 0
        %595 = vmatpush1.bf16.xpose.msra.mxu0 0
        %596 = vmatprep.subr.bf16.mxu0 0
        %597 = vmatpush1.bf16.xpose.msra.mxu0 0
        %598 = vmatprep.mubr.bf16.mxu0 0
        %599 = vmatmul.mubr.bf16.gmra.mrb[0].mxu0 %v561
        %v600 = vpop.f32.mrb[0].mxu0
        %v601 = vadd.f32 0.0, %v600
        %v602 = vpop.f32.mrb[0].mxu0
        %v603 = vpop.f32.mrb[0].mxu0
        %v604 = vpop.f32.mrb[0].mxu0
        %605 = vdwg.mxu0
        %v606 = vsel %vm448, %v601, -inf
        %607 = vmax.xlane.f32.xlu0 %v606
        %v608 = vpop.xlane.xlu0 %607
        %v609 = vsub.f32 %v601, %v608
        %v610 = vmul.f32 %v609, 1.442695
        %v611 = vpow.pop %v610
        %v612 = vsel %vm448, %v611, 0.0
        %613 = vadd.xlane.f32.xlu0 %v612
        %v614 = vpop.xlane.xlu0 %613
        %v615 = vpack.c.bf16 %v611, %v611
        %616 = vrot.lane.b32.xlu0 %v445, 56
        %v617 = vpop.permute.xlu0 %616
        %v619 = vsel %vm448, %v615, 0
        %v622 = vsel %vm510, %v617, 0
        %624 = vmatprep.subr.bf16.mxu0 0
        %625 = vmatpush1.bf16.msra.mxu0 %v622
        %626 = vmatprep.subr.bf16.mxu0 0
        %627 = vmatpush1.bf16.msra.mxu0 0
        %628 = vmatprep.subr.bf16.mxu0 0
        %629 = vmatpush1.bf16.msra.mxu0 0
        %630 = vmatprep.subr.bf16.mxu0 0
        %631 = vmatpush1.bf16.msra.mxu0 0
        %632 = vmatprep.subr.bf16.mxu0 0
        %633 = vmatpush1.bf16.msra.mxu0 0
        %634 = vmatprep.subr.bf16.mxu0 0
        %635 = vmatpush1.bf16.msra.mxu0 0
        %636 = vmatprep.subr.bf16.mxu0 0
        %637 = vmatpush1.bf16.msra.mxu0 0
        %638 = vmatprep.subr.bf16.mxu0 0
        %639 = vmatpush1.bf16.msra.mxu0 0
        %640 = vmatprep.subr.bf16.mxu0 0
        %641 = vmatpush1.bf16.msra.mxu0 0
        %642 = vmatprep.subr.bf16.mxu0 0
        %643 = vmatpush1.bf16.msra.mxu0 0
        %644 = vmatprep.subr.bf16.mxu0 0
        %645 = vmatpush1.bf16.msra.mxu0 0
        %646 = vmatprep.subr.bf16.mxu0 0
        %647 = vmatpush1.bf16.msra.mxu0 0
        %648 = vmatprep.subr.bf16.mxu0 0
        %649 = vmatpush1.bf16.msra.mxu0 0
        %650 = vmatprep.subr.bf16.mxu0 0
        %651 = vmatpush1.bf16.msra.mxu0 0
        %652 = vmatprep.subr.bf16.mxu0 0
        %653 = vmatpush1.bf16.msra.mxu0 0
        %654 = vmatprep.subr.bf16.mxu0 0
        %655 = vmatpush1.bf16.msra.mxu0 0
        %656 = vmatprep.mubr.bf16.mxu0 0
        %657 = vmatmul.mubr.bf16.gmra.mrb[0].mxu0 %v619
        %v658 = vpop.f32.mrb[0].mxu0
        %v659 = vadd.f32 0.0, %v658
        %v660 = vpop.f32.mrb[0].mxu0
        %v661 = vpop.f32.mrb[0].mxu0
        %v662 = vpop.f32.mrb[0].mxu0
        %663 = vdwg.mxu0
        %v664 = vrcp.pop %v614
        %v665 = vmul.f32 %v659, %v664
        %666 = vrot.lane.b32.xlu0 %v445, 112
        %v667 = vpop.permute.xlu0 %666
        %668 = vrot.lane.b32.xlu0 %v445, 80
        %v669 = vpop.permute.xlu0 %668
        %v671 = vsel %vm448, %v667, 0
        %v674 = vsel %vm448, %v669, 0
        %676 = vmatprep.subr.bf16.mxu0 0
        %677 = vmatpush1.bf16.xpose.msra.mxu0 %v674
        %678 = vmatprep.subr.bf16.mxu0 0
        %679 = vmatpush1.bf16.xpose.msra.mxu0 0
        %680 = vmatprep.subr.bf16.mxu0 0
        %681 = vmatpush1.bf16.xpose.msra.mxu0 0
        %682 = vmatprep.subr.bf16.mxu0 0
        %683 = vmatpush1.bf16.xpose.msra.mxu0 0
        %684 = vmatprep.subr.bf16.mxu0 0
        %685 = vmatpush1.bf16.xpose.msra.mxu0 0
        %686 = vmatprep.subr.bf16.mxu0 0
        %687 = vmatpush1.bf16.xpose.msra.mxu0 0
        %688 = vmatprep.subr.bf16.mxu0 0
        %689 = vmatpush1.bf16.xpose.msra.mxu0 0
        %690 = vmatprep.subr.bf16.mxu0 0
        %691 = vmatpush1.bf16.xpose.msra.mxu0 0
        %692 = vmatprep.subr.bf16.mxu0 0
        %693 = vmatpush1.bf16.xpose.msra.mxu0 0
        %694 = vmatprep.subr.bf16.mxu0 0
        %695 = vmatpush1.bf16.xpose.msra.mxu0 0
        %696 = vmatprep.subr.bf16.mxu0 0
        %697 = vmatpush1.bf16.xpose.msra.mxu0 0
        %698 = vmatprep.subr.bf16.mxu0 0
        %699 = vmatpush1.bf16.xpose.msra.mxu0 0
        %700 = vmatprep.subr.bf16.mxu0 0
        %701 = vmatpush1.bf16.xpose.msra.mxu0 0
        %702 = vmatprep.subr.bf16.mxu0 0
        %703 = vmatpush1.bf16.xpose.msra.mxu0 0
        %704 = vmatprep.subr.bf16.mxu0 0
        %705 = vmatpush1.bf16.xpose.msra.mxu0 0
        %706 = vmatprep.subr.bf16.mxu0 0
        %707 = vmatpush1.bf16.xpose.msra.mxu0 0
        %708 = vmatprep.mubr.bf16.mxu0 0
        %709 = vmatmul.mubr.bf16.gmra.mrb[0].mxu0 %v671
        %v710 = vpop.f32.mrb[0].mxu0
        %v711 = vadd.f32 0.0, %v710
        %v712 = vpop.f32.mrb[0].mxu0
        %v713 = vpop.f32.mrb[0].mxu0
        %v714 = vpop.f32.mrb[0].mxu0
        %715 = vdwg.mxu0
        %v716 = vsel %vm448, %v711, -inf
        %717 = vmax.xlane.f32.xlu0 %v716
        %v718 = vpop.xlane.xlu0 %717
        %v719 = vsub.f32 %v711, %v718
        %v720 = vmul.f32 %v719, 1.442695
        %v721 = vpow.pop %v720
        %v722 = vsel %vm448, %v721, 0.0
        %723 = vadd.xlane.f32.xlu0 %v722
        %v724 = vpop.xlane.xlu0 %723
        %v725 = vpack.c.bf16 %v721, %v721
        %726 = vrot.lane.b32.xlu0 %v445, 48
        %v727 = vpop.permute.xlu0 %726
        %v729 = vsel %vm448, %v725, 0
        %v732 = vsel %vm510, %v727, 0
        %734 = vmatprep.subr.bf16.mxu0 0
        %735 = vmatpush1.bf16.msra.mxu0 %v732
        %736 = vmatprep.subr.bf16.mxu0 0
        %737 = vmatpush1.bf16.msra.mxu0 0
        %738 = vmatprep.subr.bf16.mxu0 0
        %739 = vmatpush1.bf16.msra.mxu0 0
        %740 = vmatprep.subr.bf16.mxu0 0
        %741 = vmatpush1.bf16.msra.mxu0 0
        %742 = vmatprep.subr.bf16.mxu0 0
        %743 = vmatpush1.bf16.msra.mxu0 0
        %744 = vmatprep.subr.bf16.mxu0 0
        %745 = vmatpush1.bf16.msra.mxu0 0
        %746 = vmatprep.subr.bf16.mxu0 0
        %747 = vmatpush1.bf16.msra.mxu0 0
        %748 = vmatprep.subr.bf16.mxu0 0
        %749 = vmatpush1.bf16.msra.mxu0 0
        %750 = vmatprep.subr.bf16.mxu0 0
        %751 = vmatpush1.bf16.msra.mxu0 0
        %752 = vmatprep.subr.bf16.mxu0 0
        %753 = vmatpush1.bf16.msra.mxu0 0
        %754 = vmatprep.subr.bf16.mxu0 0
        %755 = vmatpush1.bf16.msra.mxu0 0
        %756 = vmatprep.subr.bf16.mxu0 0
        %757 = vmatpush1.bf16.msra.mxu0 0
        %758 = vmatprep.subr.bf16.mxu0 0
        %759 = vmatpush1.bf16.msra.mxu0 0
        %760 = vmatprep.subr.bf16.mxu0 0
        %761 = vmatpush1.bf16.msra.mxu0 0
        %762 = vmatprep.subr.bf16.mxu0 0
        %763 = vmatpush1.bf16.msra.mxu0 0
        %764 = vmatprep.subr.bf16.mxu0 0
        %765 = vmatpush1.bf16.msra.mxu0 0
        %766 = vmatprep.mubr.bf16.mxu0 0
        %767 = vmatmul.mubr.bf16.gmra.mrb[0].mxu0 %v729
        %v768 = vpop.f32.mrb[0].mxu0
        %v769 = vadd.f32 0.0, %v768
        %v770 = vpop.f32.mrb[0].mxu0
        %v771 = vpop.f32.mrb[0].mxu0
        %v772 = vpop.f32.mrb[0].mxu0
        %773 = vdwg.mxu0
        %v774 = vrcp.pop %v724
        %v775 = vmul.f32 %v769, %v774
        %776 = vrot.lane.b32.xlu0 %v445, 104
        %v777 = vpop.permute.xlu0 %776
        %778 = vrot.lane.b32.xlu0 %v445, 72
        %v779 = vpop.permute.xlu0 %778
        %v781 = vsel %vm448, %v777, 0
        %v784 = vsel %vm448, %v779, 0
        %786 = vmatprep.subr.bf16.mxu0 0
        %787 = vmatpush1.bf16.xpose.msra.mxu0 %v784
        %788 = vmatprep.subr.bf16.mxu0 0
        %789 = vmatpush1.bf16.xpose.msra.mxu0 0
        %790 = vmatprep.subr.bf16.mxu0 0
        %791 = vmatpush1.bf16.xpose.msra.mxu0 0
        %792 = vmatprep.subr.bf16.mxu0 0
        %793 = vmatpush1.bf16.xpose.msra.mxu0 0
        %794 = vmatprep.subr.bf16.mxu0 0
        %795 = vmatpush1.bf16.xpose.msra.mxu0 0
        %796 = vmatprep.subr.bf16.mxu0 0
        %797 = vmatpush1.bf16.xpose.msra.mxu0 0
        %798 = vmatprep.subr.bf16.mxu0 0
        %799 = vmatpush1.bf16.xpose.msra.mxu0 0
        %800 = vmatprep.subr.bf16.mxu0 0
        %801 = vmatpush1.bf16.xpose.msra.mxu0 0
        %802 = vmatprep.subr.bf16.mxu0 0
        %803 = vmatpush1.bf16.xpose.msra.mxu0 0
        %804 = vmatprep.subr.bf16.mxu0 0
        %805 = vmatpush1.bf16.xpose.msra.mxu0 0
        %806 = vmatprep.subr.bf16.mxu0 0
        %807 = vmatpush1.bf16.xpose.msra.mxu0 0
        %808 = vmatprep.subr.bf16.mxu0 0
        %809 = vmatpush1.bf16.xpose.msra.mxu0 0
        %810 = vmatprep.subr.bf16.mxu0 0
        %811 = vmatpush1.bf16.xpose.msra.mxu0 0
        %812 = vmatprep.subr.bf16.mxu0 0
        %813 = vmatpush1.bf16.xpose.msra.mxu0 0
        %814 = vmatprep.subr.bf16.mxu0 0
        %815 = vmatpush1.bf16.xpose.msra.mxu0 0
        %816 = vmatprep.subr.bf16.mxu0 0
        %817 = vmatpush1.bf16.xpose.msra.mxu0 0
        %818 = vmatprep.mubr.bf16.mxu0 0
        %819 = vmatmul.mubr.bf16.gmra.mrb[0].mxu0 %v781
        %v820 = vpop.f32.mrb[0].mxu0
        %v821 = vadd.f32 0.0, %v820
        %v822 = vpop.f32.mrb[0].mxu0
        %v823 = vpop.f32.mrb[0].mxu0
        %v824 = vpop.f32.mrb[0].mxu0
        %825 = vdwg.mxu0
        %v826 = vsel %vm448, %v821, -inf
        %827 = vmax.xlane.f32.xlu0 %v826
        %v828 = vpop.xlane.xlu0 %827
        %v829 = vsub.f32 %v821, %v828
        %v830 = vmul.f32 %v829, 1.442695
        %v831 = vpow.pop %v830
        %v832 = vsel %vm448, %v831, 0.0
        %833 = vadd.xlane.f32.xlu0 %v832
        %v834 = vpop.xlane.xlu0 %833
        %v835 = vpack.c.bf16 %v831, %v831
        %836 = vrot.lane.b32.xlu0 %v445, 40
        %v837 = vpop.permute.xlu0 %836
        %v839 = vsel %vm448, %v835, 0
        %v842 = vsel %vm510, %v837, 0
        %844 = vmatprep.subr.bf16.mxu0 0
        %845 = vmatpush1.bf16.msra.mxu0 %v842
        %846 = vmatprep.subr.bf16.mxu0 0
        %847 = vmatpush1.bf16.msra.mxu0 0
        %848 = vmatprep.subr.bf16.mxu0 0
        %849 = vmatpush1.bf16.msra.mxu0 0
        %850 = vmatprep.subr.bf16.mxu0 0
        %851 = vmatpush1.bf16.msra.mxu0 0
        %852 = vmatprep.subr.bf16.mxu0 0
        %853 = vmatpush1.bf16.msra.mxu0 0
        %854 = vmatprep.subr.bf16.mxu0 0
        %855 = vmatpush1.bf16.msra.mxu0 0
        %856 = vmatprep.subr.bf16.mxu0 0
        %857 = vmatpush1.bf16.msra.mxu0 0
        %858 = vmatprep.subr.bf16.mxu0 0
        %859 = vmatpush1.bf16.msra.mxu0 0
        %860 = vmatprep.subr.bf16.mxu0 0
        %861 = vmatpush1.bf16.msra.mxu0 0
        %862 = vmatprep.subr.bf16.mxu0 0
        %863 = vmatpush1.bf16.msra.mxu0 0
        %864 = vmatprep.subr.bf16.mxu0 0
        %865 = vmatpush1.bf16.msra.mxu0 0
        %866 = vmatprep.subr.bf16.mxu0 0
        %867 = vmatpush1.bf16.msra.mxu0 0
        %868 = vmatprep.subr.bf16.mxu0 0
        %869 = vmatpush1.bf16.msra.mxu0 0
        %870 = vmatprep.subr.bf16.mxu0 0
        %871 = vmatpush1.bf16.msra.mxu0 0
        %872 = vmatprep.subr.bf16.mxu0 0
        %873 = vmatpush1.bf16.msra.mxu0 0
        %874 = vmatprep.subr.bf16.mxu0 0
        %875 = vmatpush1.bf16.msra.mxu0 0
        %876 = vmatprep.mubr.bf16.mxu0 0
        %877 = vmatmul.mubr.bf16.gmra.mrb[0].mxu0 %v839
        %v878 = vpop.f32.mrb[0].mxu0
        %v879 = vadd.f32 0.0, %v878
        %v880 = vpop.f32.mrb[0].mxu0
        %v881 = vpop.f32.mrb[0].mxu0
        %v882 = vpop.f32.mrb[0].mxu0
        %883 = vdwg.mxu0
        %v884 = vrcp.pop %v834
        %v885 = vmul.f32 %v879, %v884
        %887 = vrot.lane.b32.xlu0 %v665, 8
        %v888 = vpop.permute.xlu0 %887
        %891 = vrot.lane.b32.xlu0 %v775, 16
        %v892 = vpop.permute.xlu0 %891
        %895 = vrot.lane.b32.xlu0 %v885, 24
        %v896 = vpop.permute.xlu0 %895
        %v898 = vsel %vm448, %v555, %v888
        %vm899 = vcmask 130048
        %v900 = vsel %vm899, %v898, %v892
        %vm901 = vcmask 195584
        %v902 = vsel %vm901, %v900, %v896
        %v903 = vpack.c.bf16 %v902, %v902
        %vm904 = vcmask 257024
        %905 = vst.msk [vmem:[#allocation3] sm:$0xf] %vm904, %v903
        %v906 = vld [vmem:[#allocation3] sm:$0xf]
        %v907 = vld [vmem:[%s5] sm:$0xf]
        %v908 = vld [vmem:[%s5 + $0x4] sm:$0xf]
        %v909 = vld [vmem:[%s5 + $0x8] sm:$0xf]
        %v910 = vld [vmem:[%s5 + $0xc] sm:$0xf]
        %v911 = vld [vmem:[%s6] sm:$0x1]
        %v913 = vlaneseq
        %v914 = vshrl.u32 %v913, 7
        %v915 = vsub.s32 0, %v914
        %v916 = vrot.slane %v911, %v915
        %v922 = vunpack.c.l.b16 %v907
        %v923 = vunpack.c.l.b16 %v908
        %v924 = vunpack.c.l.b16 %v909
        %v925 = vunpack.c.l.b16 %v910
        %v926 = vpack.c.b16 %v923, %v922
        %v927 = vpack.c.b16 %v925, %v924
        %vm930 = vcmask 261120
        %v932 = vsel %vm930, %v906, 0
        %934 = vmatprep.subr.bf16.mxu0 0
        %935 = vmatpush1.bf16.msra.mxu0 %v926
        %936 = vmatprep.subr.bf16.mxu0 0
        %937 = vmatpush1.bf16.msra.mxu0 %v927
        %938 = vmatprep.subr.bf16.mxu0 0
        %939 = vmatpush1.bf16.msra.mxu0 0
        %940 = vmatprep.subr.bf16.mxu0 0
        %941 = vmatpush1.bf16.msra.mxu0 0
        %942 = vmatprep.subr.bf16.mxu0 0
        %943 = vmatpush1.bf16.msra.mxu0 0
        %944 = vmatprep.subr.bf16.mxu0 0
        %945 = vmatpush1.bf16.msra.mxu0 0
        %946 = vmatprep.subr.bf16.mxu0 0
        %947 = vmatpush1.bf16.msra.mxu0 0
        %948 = vmatprep.subr.bf16.mxu0 0
        %949 = vmatpush1.bf16.msra.mxu0 0
        %950 = vmatprep.subr.bf16.mxu0 0
        %951 = vmatpush1.bf16.msra.mxu0 0
        %952 = vmatprep.subr.bf16.mxu0 0
        %953 = vmatpush1.bf16.msra.mxu0 0
        %954 = vmatprep.subr.bf16.mxu0 0
        %955 = vmatpush1.bf16.msra.mxu0 0
        %956 = vmatprep.subr.bf16.mxu0 0
        %957 = vmatpush1.bf16.msra.mxu0 0
        %958 = vmatprep.subr.bf16.mxu0 0
        %959 = vmatpush1.bf16.msra.mxu0 0
        %960 = vmatprep.subr.bf16.mxu0 0
        %961 = vmatpush1.bf16.msra.mxu0 0
        %962 = vmatprep.subr.bf16.mxu0 0
        %963 = vmatpush1.bf16.msra.mxu0 0
        %964 = vmatprep.subr.bf16.mxu0 0
        %965 = vmatpush1.bf16.msra.mxu0 0
        %966 = vmatprep.mubr.bf16.mxu0 0
        %967 = vmatmul.mubr.bf16.gmra.mrb[0].mxu0 %v932
        %v968 = vpop.f32.mrb[0].mxu0
        %v969 = vadd.f32 %v916, %v968
        %v970 = vpop.f32.mrb[0].mxu0
        %v971 = vpop.f32.mrb[0].mxu0
        %v972 = vpop.f32.mrb[0].mxu0
        %973 = vdwg.mxu0
        %974 = vst.msk [vmem:[%s334] sm:$0xff] %vm930, %v969
        %s975 = sand.u32 %s199, 1
        %s976 = scalar_lea.sflag [#allocation6], %s975
        %s977 = sand.u32 %s199, 1
        %s978 = smul.addr %s977, 8
        %s979 = scalar_lea.vmem [#allocation10], %s978
        // Predicated region
        $region65: #{tpu_custom_call.1} parent=47 // pred_check
          %p980 = pneg %p209
        $region66: #{tpu_custom_call.1} parent=47 // pred_check_branch
          %982 = sbr.rel (%p980) target = $region68
        $region67: #{tpu_custom_call.1} parent=47 // pred_region
          %s984 = ssub.s32 128, 128
          %985 = vsyncadd %s976, %s984
          %s986 = sadd.s32 %s30, %s29
          %s987 = smul.addr %s986, 128
          %s988 = scalar_lea.hbm %s7, %s987
          %s990 = sshll.u32 %s979, 4
          %s991 = int_to_ptr.vmem [resolvable:$true] %s990
          %993 = dma.vmem_to_hbm [thread:$0]  %s991, 128, %s988, %s976
        $region68: #{tpu_custom_call.1} parent=47 // pred_fallthru
          _
      $region48: #{tpu_custom_call.1} parent=5 // pred_fallthru
        _
      %p994 = scmp.le.s32.totalorder 2, %s20
      // Predicated region
      $region69: #{tpu_custom_call.1} parent=5 // pred_check
        %p995 = pneg %p994
      $region70: #{tpu_custom_call.1} parent=5 // pred_check_branch
        %997 = sbr.rel (%p995) target = $region72
      $region71: #{tpu_custom_call.1} parent=5 // pred_region
        %s998 = ssub.s32 %s20, 2
        // Predicated region
        $region73: #{tpu_custom_call.1} parent=71 // pred_check
          %p999 = pneg %p215
        $region74: #{tpu_custom_call.1} parent=71 // pred_check_branch
          %1001 = sbr.rel (%p999) target = $region76
        $region75: #{tpu_custom_call.1} parent=71 // pred_region
          %s1002 = sand.u32 %s200, 1
          %s1003 = scalar_lea.sflag [#allocation6], %s1002
          %s1004 = sand.u32 %s200, 1
          %s1005 = smul.addr %s1004, 8
          %s1006 = scalar_lea.vmem [#allocation10], %s1005
          %1007 = dma.done %s1003, 128
        $region76: #{tpu_custom_call.1} parent=71 // pred_fallthru
          _
      $region72: #{tpu_custom_call.1} parent=5 // pred_fallthru
        _
    $region6: #{tpu_custom_call.1} parent=1 // loop_footer
      %s24 = sadd.s32 1, %s20
    $region7: #{tpu_custom_call.1} parent=1 // loop_footer_branch
      %19 = sbr.rel target = $region3
    $region8: #{tpu_custom_call.1} parent=1 // loop_exit
      _
    %1008 = vsyncpa [#allocation5], 1
    %s1009 = scalar_lea.sflag [#allocation5], 1
    %1010 = vsyncpa %s1009, 1
    %1011 = vsyncpa [#allocation8], 1
    %1012 = vsyncpa [#allocation6], 1
    %s1013 = scalar_lea.sflag [#allocation6], 1
    %1014 = vsyncpa %s1013, 1

// kernel: tpu_custom_call.1
$region0: #{tpu_custom_call.1}
  #allocation0 [shape = 'u32[]', space=smem, size = 0x4, offset = 0x4, fixed_abs, tag = 'smem constant byte address 0x4 - core index']
  #allocation1 [shape = 'u32[144,128]{1,0:T(1,128)}', space=vmem, size = 0x12000, scoped, tag = 'internal scratch']
  #allocation2 [shape = 'bf16[8,96]{1,0:T(8,128)(2,1)}', space=vmem, size = 0x800, scoped, tag = 'scratch operand']
  #allocation3 [shape = 'bf16[8,32]{1,0:T(8,128)(2,1)}', space=vmem, size = 0x800, scoped, tag = 'scratch operand']
  %s0 = inlined_call_operand.hbm [shape: f32[2,8,32], index: 0, kind: input, shape index: {}]
  %s1 = inlined_call_operand.vmem [shape: f32[1,32], index: 1, kind: input, shape index: {}]
  %s2 = inlined_call_operand.vmem [shape: f32[1,32], index: 2, kind: input, shape index: {}]
  %s3 = inlined_call_operand.hbm [shape: bf16[32,96], index: 3, kind: input, shape index: {}]
  %s4 = inlined_call_operand.hbm [shape: f32[1,96], index: 4, kind: input, shape index: {}]
  %s5 = inlined_call_operand.vmem [shape: bf16[32,32], index: 5, kind: input, shape index: {}]
  %s6 = inlined_call_operand.vmem [shape: f32[1,32], index: 6, kind: input, shape index: {}]
  %s7 = inlined_call_operand.hbm [shape: f32[2,8,32], index: 7, kind: output, shape index: {}]
  %s8 = sld [smem:[#allocation0]]
  $region77: #{tpu_custom_call.1} parent=0
    _
  %s10 = ssub.s32 1, %s8
  %s11 = scalar_select 0, %s10, %s8
  $region1: #{tpu_custom_call.1} parent=0
    #allocation4 [shape = 'u8[8192]{0}', space=vmem, size = 0x2000, scoped, tag = 'input window, operand 0']
    #allocation5 [shape = 's32[2]{0}', space=sflag, size = 0x8, scoped, tag = 'scoped memory for tpu_custom_call.1']
    #allocation6 [shape = 's32[2]{0}', space=sflag, size = 0x8, scoped, tag = 'scoped memory for tpu_custom_call.1']
    #allocation7 [shape = 'u8[8192]{0}', space=vmem, size = 0x2000, scoped, tag = 'input window, operand 3, single buffered']
    #allocation8 [shape = 's32[1]{0}', space=sflag, size = 0x4, scoped, tag = 'scoped memory for tpu_custom_call.1']
    #allocation9 [shape = 'u8[512]{0}', space=vmem, size = 0x400, scoped, tag = 'input window, operand 4, single buffered']
    #allocation10 [shape = 'u8[8192]{0}', space=vmem, size = 0x2000, scoped, tag = 'output window, operand 0']
    %12 = vsyncpa [#allocation5], 0
    %s13 = scalar_lea.sflag [#allocation5], 1
    %14 = vsyncpa %s13, 0
    %15 = vsyncpa [#allocation8], 0
    %16 = vsyncpa [#allocation6], 0
    %s17 = scalar_lea.sflag [#allocation6], 1
    %18 = vsyncpa %s17, 0
    loop: start=0, step=1, limit=4
    $region2: #{tpu_custom_call.1} parent=1 // loop_pre_header
      _
    $region3: #{tpu_custom_call.1} parent=1 // loop_header
      %s20 = sphi 0, %s24
      %p21 = scmp.ge.s32.totalorder %s20, 4
      %s27 = sphi 0, %s39
      %s28 = sphi 0, %s35
      %s29 = sphi 0, %s27
      %s30 = sphi 0, %s28
      %s31 = sphi 0, %s29
      %s32 = sphi 0, %s30
      %s42 = sphi 0, %s44
      %s45 = sphi 0, %s42
      %s46 = sphi 0, %s45
      %s62 = sphi 0, %s46
      %s66 = sphi 0, %s66
      %s68 = sphi 0, %s66
      %s69 = sphi 0, %s68
      %s83 = sphi 0, %s69
      %s87 = sphi 0, %s87
      %s89 = sphi 0, %s87
      %s90 = sphi 0, %s89
      %s104 = sphi 0, %s90
      %s108 = sphi 0, %s108
      %s110 = sphi 0, %s108
      %s111 = sphi 0, %s110
      %s125 = sphi 0, %s111
      %s129 = sphi 0, %s129
      %s131 = sphi 0, %s129
      %s132 = sphi 0, %s131
      %s146 = sphi 0, %s132
      %s150 = sphi 0, %s150
      %s152 = sphi 0, %s150
      %s153 = sphi 0, %s152
      %s167 = sphi 0, %s153
      %s171 = sphi 0, %s171
      %s173 = sphi 0, %s171
      %s174 = sphi 0, %s173
      %s188 = sphi 0, %s174
      %s196 = sphi 0, %s198
      %s199 = sphi 0, %s196
      %s200 = sphi 0, %s199
      %s216 = sphi 0, %s200
    $region4: #{tpu_custom_call.1} parent=1 // loop_header_branch
      %23 = sbr.rel (%p21) target = $region8
    $region5: #{tpu_custom_call.1} parent=1 // loop_body
      %s25 = ssub.s32 %s20, 1
      %s26 = ssub.s32 %s20, 2
      %s33 = sadd.s32 1, %s28
      %p34 = scmp.ge.s32.totalorder %s33, 1
      %s35 = scalar_select %p34, 0, %s33
      %s36 = sadd.s32 1, %s27
      %s37 = scalar_select %p34, %s36, %s27
      %p38 = scmp.ge.s32.totalorder %s37, 2
      %s39 = scalar_select %p38, 0, %s37
      %s40 = ssub.s32 %s27, %s39
      %p41 = scmp.eq.s32.totalorder %s40, 0
      %s43 = sadd.s32 %s42, 1
      %s44 = scalar_select %p41, %s42, %s43
      %p47 = pneg %p41
      %p48 = scmp.eq.s32.totalorder %s20, 1
      %p49 = por %p47, %p48
      %p50 = scmp.ne.s32.totalorder %s42, %s45
      %p51 = scmp.eq.s32.totalorder %s20, 0
      %p52 = por %p50, %p51
      %p53 = scmp.ne.s32.totalorder %s42, %s45
      %p54 = scmp.eq.s32.totalorder %s25, 1
      %p55 = por %p53, %p54
      %p56 = scmp.ne.s32.totalorder %s45, %s46
      %p57 = scmp.eq.s32.totalorder %s25, 0
      %p58 = por %p56, %p57
      %p59 = scmp.ne.s32.totalorder %s45, %s46
      %p60 = scmp.eq.s32.totalorder %s26, 1
      %p61 = por %p59, %p60
      %p63 = scmp.ne.s32.totalorder %s46, %s62
      %p64 = scmp.eq.s32.totalorder %s26, 0
      %p65 = por %p63, %p64
      %s67 = sadd.s32 %s66, 1
      %p70 = scmp.eq.s32.totalorder %s20, 1
      %p71 = scmp.ne.s32.totalorder %s66, %s68
      %p72 = scmp.eq.s32.totalorder %s20, 0
      %p73 = por %p71, %p72
      %p74 = scmp.ne.s32.totalorder %s66, %s68
      %p75 = scmp.eq.s32.totalorder %s25, 1
      %p76 = por %p74, %p75
      %p77 = scmp.ne.s32.totalorder %s68, %s69
      %p78 = scmp.eq.s32.totalorder %s25, 0
      %p79 = por %p77, %p78
      %p80 = scmp.ne.s32.totalorder %s68, %s69
      %p81 = scmp.eq.s32.totalorder %s26, 1
      %p82 = por %p80, %p81
      %p84 = scmp.ne.s32.totalorder %s69, %s83
      %p85 = scmp.eq.s32.totalorder %s26, 0
      %p86 = por %p84, %p85
      %s88 = sadd.s32 %s87, 1
      %p91 = scmp.eq.s32.totalorder %s20, 1
      %p92 = scmp.ne.s32.totalorder %s87, %s89
      %p93 = scmp.eq.s32.totalorder %s20, 0
      %p94 = por %p92, %p93
      %p95 = scmp.ne.s32.totalorder %s87, %s89
      %p96 = scmp.eq.s32.totalorder %s25, 1
      %p97 = por %p95, %p96
      %p98 = scmp.ne.s32.totalorder %s89, %s90
      %p99 = scmp.eq.s32.totalorder %s25, 0
      %p100 = por %p98, %p99
      %p101 = scmp.ne.s32.totalorder %s89, %s90
      %p102 = scmp.eq.s32.totalorder %s26, 1
      %p103 = por %p101, %p102
      %p105 = scmp.ne.s32.totalorder %s90, %s104
      %p106 = scmp.eq.s32.totalorder %s26, 0
      %p107 = por %p105, %p106
      %s109 = sadd.s32 %s108, 1
      %p112 = scmp.eq.s32.totalorder %s20, 1
      %p113 = scmp.ne.s32.totalorder %s108, %s110
      %p114 = scmp.eq.s32.totalorder %s20, 0
      %p115 = por %p113, %p114
      %p116 = scmp.ne.s32.totalorder %s108, %s110
      %p117 = scmp.eq.s32.totalorder %s25, 1
      %p118 = por %p116, %p117
      %p119 = scmp.ne.s32.totalorder %s110, %s111
      %p120 = scmp.eq.s32.totalorder %s25, 0
      %p121 = por %p119, %p120
      %p122 = scmp.ne.s32.totalorder %s110, %s111
      %p123 = scmp.eq.s32.totalorder %s26, 1
      %p124 = por %p122, %p123
      %p126 = scmp.ne.s32.totalorder %s111, %s125
      %p127 = scmp.eq.s32.totalorder %s26, 0
      %p128 = por %p126, %p127
      %s130 = sadd.s32 %s129, 1
      %p133 = scmp.eq.s32.totalorder %s20, 1
      %p134 = scmp.ne.s32.totalorder %s129, %s131
      %p135 = scmp.eq.s32.totalorder %s20, 0
      %p136 = por %p134, %p135
      %p137 = scmp.ne.s32.totalorder %s129, %s131
      %p138 = scmp.eq.s32.totalorder %s25, 1
      %p139 = por %p137, %p138
      %p140 = scmp.ne.s32.totalorder %s131, %s132
      %p141 = scmp.eq.s32.totalorder %s25, 0
      %p142 = por %p140, %p141
      %p143 = scmp.ne.s32.totalorder %s131, %s132
      %p144 = scmp.eq.s32.totalorder %s26, 1
      %p145 = por %p143, %p144
      %p147 = scmp.ne.s32.totalorder %s132, %s146
      %p148 = scmp.eq.s32.totalorder %s26, 0
      %p149 = por %p147, %p148
      %s151 = sadd.s32 %s150, 1
      %p154 = scmp.eq.s32.totalorder %s20, 1
      %p155 = scmp.ne.s32.totalorder %s150, %s152
      %p156 = scmp.eq.s32.totalorder %s20, 0
      %p157 = por %p155, %p156
      %p158 = scmp.ne.s32.totalorder %s150, %s152
      %p159 = scmp.eq.s32.totalorder %s25, 1
      %p160 = por %p158, %p159
      %p161 = scmp.ne.s32.totalorder %s152, %s153
      %p162 = scmp.eq.s32.totalorder %s25, 0
      %p163 = por %p161, %p162
      %p164 = scmp.ne.s32.totalorder %s152, %s153
      %p165 = scmp.eq.s32.totalorder %s26, 1
      %p166 = por %p164, %p165
      %p168 = scmp.ne.s32.totalorder %s153, %s167
      %p169 = scmp.eq.s32.totalorder %s26, 0
      %p170 = por %p168, %p169
      %s172 = sadd.s32 %s171, 1
      %p175 = scmp.eq.s32.totalorder %s20, 1
      %p176 = scmp.ne.s32.totalorder %s171, %s173
      %p177 = scmp.eq.s32.totalorder %s20, 0
      %p178 = por %p176, %p177
      %p179 = scmp.ne.s32.totalorder %s171, %s173
      %p180 = scmp.eq.s32.totalorder %s25, 1
      %p181 = por %p179, %p180
      %p182 = scmp.ne.s32.totalorder %s173, %s174
      %p183 = scmp.eq.s32.totalorder %s25, 0
      %p184 = por %p182, %p183
      %p185 = scmp.ne.s32.totalorder %s173, %s174
      %p186 = scmp.eq.s32.totalorder %s26, 1
      %p187 = por %p185, %p186
      %p189 = scmp.ne.s32.totalorder %s174, %s188
      %p190 = scmp.eq.s32.totalorder %s26, 0
      %p191 = por %p189, %p190
      %s192 = ssub.s32 %s27, %s39
      %s193 = ssub.s32 %s28, %s35
      %s194 = sor.u32 %s192, %s193
      %p195 = scmp.eq.s32.totalorder %s194, 0
      %s197 = sadd.s32 %s196, 1
      %s198 = scalar_select %p195, %s196, %s197
      %p201 = pneg %p195
      %p202 = scmp.eq.s32.totalorder %s20, 1
      %p203 = por %p201, %p202
      %p204 = scmp.ne.s32.totalorder %s196, %s199
      %p205 = scmp.eq.s32.totalorder %s20, 0
      %p206 = por %p204, %p205
      %p207 = scmp.ne.s32.totalorder %s196, %s199
      %p208 = scmp.eq.s32.totalorder %s25, 1
      %p209 = por %p207, %p208
      %p210 = scmp.ne.s32.totalorder %s199, %s200
      %p211 = scmp.eq.s32.totalorder %s25, 0
      %p212 = por %p210, %p211
      %p213 = scmp.ne.s32.totalorder %s199, %s200
      %p214 = scmp.eq.s32.totalorder %s26, 1
      %p215 = por %p213, %p214
      %p217 = scmp.ne.s32.totalorder %s200, %s216
      %p218 = scmp.eq.s32.totalorder %s26, 0
      %p219 = por %p217, %p218
      %p220 = scmp.le.s32.totalorder 1, %s20
      %p221 = scmp.lt.s32.totalorder %s20, 3
      %p222 = pnand %p220, %p221
      %p223 = pneg %p222
      // Predicated region
      $region9: #{tpu_custom_call.1} parent=5 // pred_check
        _
      $region10: #{tpu_custom_call.1} parent=5 // pred_check_branch
        %225 = sbr.rel (%p222) target = $region12
      $region11: #{tpu_custom_call.1} parent=5 // pred_region
        %s226 = ssub.s32 %s20, 1
        // Predicated region
        $region13: #{tpu_custom_call.1} parent=11 // pred_check
          %p227 = pneg %p79
        $region14: #{tpu_custom_call.1} parent=11 // pred_check_branch
          %229 = sbr.rel (%p227) target = $region16
        $region15: #{tpu_custom_call.1} parent=11 // pred_region
          _
        $region16: #{tpu_custom_call.1} parent=11 // pred_fallthru
          _
        // Predicated region
        $region17: #{tpu_custom_call.1} parent=11 // pred_check
          %p230 = pneg %p100
        $region18: #{tpu_custom_call.1} parent=11 // pred_check_branch
          %232 = sbr.rel (%p230) target = $region20
        $region19: #{tpu_custom_call.1} parent=11 // pred_region
          _
        $region20: #{tpu_custom_call.1} parent=11 // pred_fallthru
          _
        // Predicated region
        $region21: #{tpu_custom_call.1} parent=11 // pred_check
          %p233 = pneg %p121
        $region22: #{tpu_custom_call.1} parent=11 // pred_check_branch
          %235 = sbr.rel (%p233) target = $region24
        $region23: #{tpu_custom_call.1} parent=11 // pred_region
          %s237 = ssub.s32 256, 256
          %238 = vsyncadd [#allocation8], %s237
          %s239 = sshll.u32 [#allocation7], 4
          %s240 = int_to_ptr.vmem [resolvable:$true] %s239
          %245 = dma.hbm_to_vmem [thread:$0]  %s3, 256, %s240, [#allocation8], 64, 64, 4
        $region24: #{tpu_custom_call.1} parent=11 // pred_fallthru
          _
        // Predicated region
        $region25: #{tpu_custom_call.1} parent=11 // pred_check
          %p246 = pneg %p142
        $region26: #{tpu_custom_call.1} parent=11 // pred_check_branch
          %248 = sbr.rel (%p246) target = $region28
        $region27: #{tpu_custom_call.1} parent=11 // pred_region
          %s250 = ssub.s32 16, 16
          %251 = vsyncadd [#allocation8], %s250
          %s253 = sshll.u32 [#allocation9], 4
          %s254 = int_to_ptr.vmem [resolvable:$true] %s253
          %256 = dma.hbm_to_vmem [thread:$0]  %s4, 16, %s254, [#allocation8]
        $region28: #{tpu_custom_call.1} parent=11 // pred_fallthru
          _
        // Predicated region
        $region29: #{tpu_custom_call.1} parent=11 // pred_check
          %p257 = pneg %p163
        $region30: #{tpu_custom_call.1} parent=11 // pred_check_branch
          %259 = sbr.rel (%p257) target = $region32
        $region31: #{tpu_custom_call.1} parent=11 // pred_region
          _
        $region32: #{tpu_custom_call.1} parent=11 // pred_fallthru
          _
        // Predicated region
        $region33: #{tpu_custom_call.1} parent=11 // pred_check
          %p260 = pneg %p184
        $region34: #{tpu_custom_call.1} parent=11 // pred_check_branch
          %262 = sbr.rel (%p260) target = $region36
        $region35: #{tpu_custom_call.1} parent=11 // pred_region
          _
        $region36: #{tpu_custom_call.1} parent=11 // pred_fallthru
          _
      $region12: #{tpu_custom_call.1} parent=5 // pred_fallthru
        _
      %p263 = scmp.lt.s32.totalorder %s20, 2
      // Predicated region
      $region37: #{tpu_custom_call.1} parent=5 // pred_check
        %p264 = pneg %p263
      $region38: #{tpu_custom_call.1} parent=5 // pred_check_branch
        %266 = sbr.rel (%p264) target = $region40
      $region39: #{tpu_custom_call.1} parent=5 // pred_region
        // Predicated region
        $region41: #{tpu_custom_call.1} parent=39 // pred_check
          %p267 = pneg %p52
        $region42: #{tpu_custom_call.1} parent=39 // pred_check_branch
          %269 = sbr.rel (%p267) target = $region44
        $region43: #{tpu_custom_call.1} parent=39 // pred_region
          %s270 = sand.u32 %s42, 1
          %s271 = scalar_lea.sflag [#allocation5], %s270
          %s272 = sand.u32 %s42, 1
          %s273 = smul.addr %s272, 8
          %s274 = scalar_lea.vmem [#allocation4], %s273
          %s276 = ssub.s32 128, 128
          %277 = vsyncadd %s271, %s276
          %s278 = smul.addr %s27, 128
          %s279 = scalar_lea.hbm %s0, %s278
          %s281 = sshll.u32 %s274, 4
          %s282 = int_to_ptr.vmem [resolvable:$true] %s281
          %284 = dma.hbm_to_vmem [thread:$0]  %s279, 128, %s282, %s271
        $region44: #{tpu_custom_call.1} parent=39 // pred_fallthru
          _
      $region40: #{tpu_custom_call.1} parent=5 // pred_fallthru
        _
      %p285 = scmp.le.s32.totalorder 1, %s20
      %p286 = scmp.lt.s32.totalorder %s20, 3
      %p287 = pnand %p285, %p286
      %p288 = pneg %p287
      // Predicated region
      $region45: #{tpu_custom_call.1} parent=5 // pred_check
        _
      $region46: #{tpu_custom_call.1} parent=5 // pred_check_branch
        %290 = sbr.rel (%p287) target = $region48
      $region47: #{tpu_custom_call.1} parent=5 // pred_region
        %s291 = ssub.s32 %s20, 1
        %s292 = sand.u32 %s45, 1
        %s293 = scalar_lea.sflag [#allocation5], %s292
        %s294 = sand.u32 %s45, 1
        %s295 = smul.addr %s294, 8
        %s296 = scalar_lea.vmem [#allocation4], %s295
        // Predicated region
        $region49: #{tpu_custom_call.1} parent=47 // pred_check
          %p297 = pneg %p58
        $region50: #{tpu_custom_call.1} parent=47 // pred_check_branch
          %299 = sbr.rel (%p297) target = $region52
        $region51: #{tpu_custom_call.1} parent=47 // pred_region
          %300 = dma.done %s293, 128
        $region52: #{tpu_custom_call.1} parent=47 // pred_fallthru
          _
        // Predicated region
        $region53: #{tpu_custom_call.1} parent=47 // pred_check
          %p301 = pneg %p121
        $region54: #{tpu_custom_call.1} parent=47 // pred_check_branch
          %303 = sbr.rel (%p301) target = $region56
        $region55: #{tpu_custom_call.1} parent=47 // pred_region
          %304 = dma.done [#allocation8], 256
        $region56: #{tpu_custom_call.1} parent=47 // pred_fallthru
          _
        // Predicated region
        $region57: #{tpu_custom_call.1} parent=47 // pred_check
          %p305 = pneg %p142
        $region58: #{tpu_custom_call.1} parent=47 // pred_check_branch
          %307 = sbr.rel (%p305) target = $region60
        $region59: #{tpu_custom_call.1} parent=47 // pred_region
          %308 = dma.done [#allocation8], 16
        $region60: #{tpu_custom_call.1} parent=47 // pred_fallthru
          _
        %s309 = sand.u32 %s45, 1
        %s310 = scalar_lea.sflag [#allocation5], %s309
        %s311 = sand.u32 %s45, 1
        %s312 = smul.addr %s311, 8
        %s313 = scalar_lea.vmem [#allocation4], %s312
        %p314 = pneg %p58
        %p315 = pneg %p55
        %p316 = pneg %p79
        %p317 = pneg %p76
        %p318 = pneg %p100
        %p319 = pneg %p97
        %p320 = pneg %p121
        %p321 = pneg %p118
        %p322 = pneg %p142
        %p323 = pneg %p139
        %p324 = pneg %p163
        %p325 = pneg %p160
        %p326 = pneg %p184
        %p327 = pneg %p181
        %p328 = pneg %p212
        %p329 = pneg %p209
        %s330 = sand.u32 %s199, 1
        %s331 = scalar_lea.sflag [#allocation6], %s330
        %s332 = sand.u32 %s199, 1
        %s333 = smul.addr %s332, 8
        %s334 = scalar_lea.vmem [#allocation10], %s333
        %p336 = scmp.eq.s32.totalorder %s30, 0
        // Predicated region
        $region61: #{tpu_custom_call.1} parent=47 // pred_check
          %p337 = pneg %p336
        $region62: #{tpu_custom_call.1} parent=47 // pred_check_branch
          %339 = sbr.rel (%p337) target = $region64
        $region63: #{tpu_custom_call.1} parent=47 // pred_region
          %v340 = vld [vmem:[%s296] sm:$0xff]
          %vm341 = vcmask 261120
          %v342 = vsel %vm341, %v340, 0.0
          %343 = vadd.xlane.f32.xlu0 %v342
          %v344 = vpop.xlane.xlu0 %343
          %v345 = vrcp.pop 32.0
          %v346 = vmul.f32 %v344, %v345
          %v347 = vsub.f32 %v340, %v346
          %v348 = vmul.f32 %v347, %v347
          %v349 = vsel %vm341, %v348, 0.0
          %350 = vadd.xlane.f32.xlu0 %v349
          %v351 = vpop.xlane.xlu0 %350
          %v352 = vmul.f32 %v351, %v345
          %v353 = vadd.f32 %v352, 1e-05
          %v354 = vrsqrt.pop %v353
          %v355 = vmul.f32 %v347, %v354
          %v356 = vld [vmem:[%s1] sm:$0x1]
          %v358 = vlaneseq
          %v359 = vshrl.u32 %v358, 7
          %v360 = vsub.s32 0, %v359
          %v361 = vrot.slane %v356, %v360
          %v363 = vmul.f32 %v355, %v361
          %v364 = vld [vmem:[%s2] sm:$0x1]
          %v366 = vlaneseq
          %v367 = vshrl.u32 %v366, 7
          %v368 = vsub.s32 0, %v367
          %v369 = vrot.slane %v364, %v368
          %v371 = vadd.f32 %v363, %v369
          %v372 = vpack.c.bf16 %v371, %v371
          %v373 = vld [vmem:[#allocation7] sm:$0xf]
          %v374 = vld [vmem:[#allocation7 + $0x4] sm:$0xf]
          %v375 = vld [vmem:[#allocation7 + $0x8] sm:$0xf]
          %v376 = vld [vmem:[#allocation7 + $0xc] sm:$0xf]
          %v377 = vld [vmem:[#allocation9] sm:$0x1]
          %v379 = vlaneseq
          %v380 = vshrl.u32 %v379, 7
          %v381 = vsub.s32 0, %v380
          %v382 = vrot.slane %v377, %v381
          %v388 = vunpack.c.l.b16 %v373
          %v389 = vunpack.c.l.b16 %v374
          %v390 = vunpack.c.l.b16 %v375
          %v391 = vunpack.c.l.b16 %v376
          %v392 = vpack.c.b16 %v389, %v388
          %v393 = vpack.c.b16 %v391, %v390
          %v397 = vsel %vm341, %v372, 0
          %399 = vmatprep.subr.bf16.mxu0 0
          %400 = vmatpush1.bf16.msra.mxu0 %v392
          %401 = vmatprep.subr.bf16.mxu0 0
          %402 = vmatpush1.bf16.msra.mxu0 %v393
          %403 = vmatprep.subr.bf16.mxu0 0
          %404 = vmatpush1.bf16.msra.mxu0 0
          %405 = vmatprep.subr.bf16.mxu0 0
          %406 = vmatpush1.bf16.msra.mxu0 0
          %407 = vmatprep.subr.bf16.mxu0 0
          %408 = vmatpush1.bf16.msra.mxu0 0
          %409 = vmatprep.subr.bf16.mxu0 0
          %410 = vmatpush1.bf16.msra.mxu0 0
          %411 = vmatprep.subr.bf16.mxu0 0
          %412 = vmatpush1.bf16.msra.mxu0 0
          %413 = vmatprep.subr.bf16.mxu0 0
          %414 = vmatpush1.bf16.msra.mxu0 0
          %415 = vmatprep.subr.bf16.mxu0 0
          %416 = vmatpush1.bf16.msra.mxu0 0
          %417 = vmatprep.subr.bf16.mxu0 0
          %418 = vmatpush1.bf16.msra.mxu0 0
          %419 = vmatprep.subr.bf16.mxu0 0
          %420 = vmatpush1.bf16.msra.mxu0 0
          %421 = vmatprep.subr.bf16.mxu0 0
          %422 = vmatpush1.bf16.msra.mxu0 0
          %423 = vmatprep.subr.bf16.mxu0 0
          %424 = vmatpush1.bf16.msra.mxu0 0
          %425 = vmatprep.subr.bf16.mxu0 0
          %426 = vmatpush1.bf16.msra.mxu0 0
          %427 = vmatprep.subr.bf16.mxu0 0
          %428 = vmatpush1.bf16.msra.mxu0 0
          %429 = vmatprep.subr.bf16.mxu0 0
          %430 = vmatpush1.bf16.msra.mxu0 0
          %431 = vmatprep.mubr.bf16.mxu0 0
          %432 = vmatmul.mubr.bf16.gmra.mrb[0].mxu0 %v397
          %v433 = vpop.f32.mrb[0].mxu0
          %v434 = vadd.f32 %v382, %v433
          %v435 = vpop.f32.mrb[0].mxu0
          %v436 = vpop.f32.mrb[0].mxu0
          %v437 = vpop.f32.mrb[0].mxu0
          %438 = vdwg.mxu0
          %v439 = vpack.c.bf16 %v434, %v434
          %vm440 = vcmask 781312
          %441 = vst.msk [vmem:[#allocation2] sm:$0xf] %vm440, %v439
        $region64: #{tpu_custom_call.1} parent=47 // pred_fallthru
          _
        %v442 = vld [vmem:[#allocation2] sm:$0xf]
        %v444 = vunpack.c.l.b16 %v442
        %v445 = vpack.c.b16 %v444, %v444
        %446 = vrot.lane.b32.xlu0 %v445, 96
        %v447 = vpop.permute.xlu0 %446
        %vm448 = vcmask 64512
        %v450 = vsel %vm448, %v442, 0
        %v453 = vsel %vm448, %v447, 0
        %455 = vmatprep.subr.bf16.mxu0 0
        %456 = vmatpush1.bf16.xpose.msra.mxu0 %v453
        %457 = vmatprep.subr.bf16.mxu0 0
        %458 = vmatpush1.bf16.xpose.msra.mxu0 0
        %459 = vmatprep.subr.bf16.mxu0 0
        %460 = vmatpush1.bf16.xpose.msra.mxu0 0
        %461 = vmatprep.subr.bf16.mxu0 0
        %462 = vmatpush1.bf16.xpose.msra.mxu0 0
        %463 = vmatprep.subr.bf16.mxu0 0
        %464 = vmatpush1.bf16.xpose.msra.mxu0 0
        %465 = vmatprep.subr.bf16.mxu0 0
        %466 = vmatpush1.bf16.xpose.msra.mxu0 0
        %467 = vmatprep.subr.bf16.mxu0 0
        %468 = vmatpush1.bf16.xpose.msra.mxu0 0
        %469 = vmatprep.subr.bf16.mxu0 0
        %470 = vmatpush1.bf16.xpose.msra.mxu0 0
        %471 = vmatprep.subr.bf16.mxu0 0
        %472 = vmatpush1.bf16.xpose.msra.mxu0 0
        %473 = vmatprep.subr.bf16.mxu0 0
        %474 = vmatpush1.bf16.xpose.msra.mxu0 0
        %475 = vmatprep.subr.bf16.mxu0 0
        %476 = vmatpush1.bf16.xpose.msra.mxu0 0
        %477 = vmatprep.subr.bf16.mxu0 0
        %478 = vmatpush1.bf16.xpose.msra.mxu0 0
        %479 = vmatprep.subr.bf16.mxu0 0
        %480 = vmatpush1.bf16.xpose.msra.mxu0 0
        %481 = vmatprep.subr.bf16.mxu0 0
        %482 = vmatpush1.bf16.xpose.msra.mxu0 0
        %483 = vmatprep.subr.bf16.mxu0 0
        %484 = vmatpush1.bf16.xpose.msra.mxu0 0
        %485 = vmatprep.subr.bf16.mxu0 0
        %486 = vmatpush1.bf16.xpose.msra.mxu0 0
        %487 = vmatprep.mubr.bf16.mxu0 0
        %488 = vmatmul.mubr.bf16.gmra.mrb[0].mxu0 %v450
        %v489 = vpop.f32.mrb[0].mxu0
        %v490 = vadd.f32 0.0, %v489
        %v491 = vpop.f32.mrb[0].mxu0
        %v492 = vpop.f32.mrb[0].mxu0
        %v493 = vpop.f32.mrb[0].mxu0
        %494 = vdwg.mxu0
        %v495 = vsel %vm448, %v490, -inf
        %496 = vmax.xlane.f32.xlu0 %v495
        %v497 = vpop.xlane.xlu0 %496
        %v498 = vsub.f32 %v490, %v497
        %v499 = vmul.f32 %v498, 1.442695
        %v500 = vpow.pop %v499
        %v501 = vsel %vm448, %v500, 0.0
        %502 = vadd.xlane.f32.xlu0 %v501
        %v503 = vpop.xlane.xlu0 %502
        %v504 = vpack.c.bf16 %v500, %v500
        %505 = vrot.lane.b32.xlu0 %v445, 64
        %v506 = vpop.permute.xlu0 %505
        %v508 = vsel %vm448, %v504, 0
        %vm510 = vcmask 1043456
        %v512 = vsel %vm510, %v506, 0
        %514 = vmatprep.subr.bf16.mxu0 0
        %515 = vmatpush1.bf16.msra.mxu0 %v512
        %516 = vmatprep.subr.bf16.mxu0 0
        %517 = vmatpush1.bf16.msra.mxu0 0
        %518 = vmatprep.subr.bf16.mxu0 0
        %519 = vmatpush1.bf16.msra.mxu0 0
        %520 = vmatprep.subr.bf16.mxu0 0
        %521 = vmatpush1.bf16.msra.mxu0 0
        %522 = vmatprep.subr.bf16.mxu0 0
        %523 = vmatpush1.bf16.msra.mxu0 0
        %524 = vmatprep.subr.bf16.mxu0 0
        %525 = vmatpush1.bf16.msra.mxu0 0
        %526 = vmatprep.subr.bf16.mxu0 0
        %527 = vmatpush1.bf16.msra.mxu0 0
        %528 = vmatprep.subr.bf16.mxu0 0
        %529 = vmatpush1.bf16.msra.mxu0 0
        %530 = vmatprep.subr.bf16.mxu0 0
        %531 = vmatpush1.bf16.msra.mxu0 0
        %532 = vmatprep.subr.bf16.mxu0 0
        %533 = vmatpush1.bf16.msra.mxu0 0
        %534 = vmatprep.subr.bf16.mxu0 0
        %535 = vmatpush1.bf16.msra.mxu0 0
        %536 = vmatprep.subr.bf16.mxu0 0
        %537 = vmatpush1.bf16.msra.mxu0 0
        %538 = vmatprep.subr.bf16.mxu0 0
        %539 = vmatpush1.bf16.msra.mxu0 0
        %540 = vmatprep.subr.bf16.mxu0 0
        %541 = vmatpush1.bf16.msra.mxu0 0
        %542 = vmatprep.subr.bf16.mxu0 0
        %543 = vmatpush1.bf16.msra.mxu0 0
        %544 = vmatprep.subr.bf16.mxu0 0
        %545 = vmatpush1.bf16.msra.mxu0 0
        %546 = vmatprep.mubr.bf16.mxu0 0
        %547 = vmatmul.mubr.bf16.gmra.mrb[0].mxu0 %v508
        %v548 = vpop.f32.mrb[0].mxu0
        %v549 = vadd.f32 0.0, %v548
        %v550 = vpop.f32.mrb[0].mxu0
        %v551 = vpop.f32.mrb[0].mxu0
        %v552 = vpop.f32.mrb[0].mxu0
        %553 = vdwg.mxu0
        %v554 = vrcp.pop %v503
        %v555 = vmul.f32 %v549, %v554
        %556 = vrot.lane.b32.xlu0 %v445, 120
        %v557 = vpop.permute.xlu0 %556
        %558 = vrot.lane.b32.xlu0 %v445, 88
        %v559 = vpop.permute.xlu0 %558
        %v561 = vsel %vm448, %v557, 0
        %v564 = vsel %vm448, %v559, 0
        %566 = vmatprep.subr.bf16.mxu0 0
        %567 = vmatpush1.bf16.xpose.msra.mxu0 %v564
        %568 = vmatprep.subr.bf16.mxu0 0
        %569 = vmatpush1.bf16.xpose.msra.mxu0 0
        %570 = vmatprep.subr.bf16.mxu0 0
        %571 = vmatpush1.bf16.xpose.msra.mxu0 0
        %572 = vmatprep.subr.bf16.mxu0 0
        %573 = vmatpush1.bf16.xpose.msra.mxu0 0
        %574 = vmatprep.subr.bf16.mxu0 0
        %575 = vmatpush1.bf16.xpose.msra.mxu0 0
        %576 = vmatprep.subr.bf16.mxu0 0
        %577 = vmatpush1.bf16.xpose.msra.mxu0 0
        %578 = vmatprep.subr.bf16.mxu0 0
        %579 = vmatpush1.bf16.xpose.msra.mxu0 0
        %580 = vmatprep.subr.bf16.mxu0 0
        %581 = vmatpush1.bf16.xpose.msra.mxu0 0
        %582 = vmatprep.subr.bf16.mxu0 0
        %583 = vmatpush1.bf16.xpose.msra.mxu0 0
        %584 = vmatprep.subr.bf16.mxu0 0
        %585 = vmatpush1.bf16.xpose.msra.mxu0 0
        %586 = vmatprep.subr.bf16.mxu0 0
        %587 = vmatpush1.bf16.xpose.msra.mxu0 0
        %588 = vmatprep.subr.bf16.mxu0 0
        %589 = vmatpush1.bf16.xpose.msra.mxu0 0
        %590 = vmatprep.subr.bf16.mxu0 0
        %591 = vmatpush1.bf16.xpose.msra.mxu0 0
        %592 = vmatprep.subr.bf16.mxu0 0
        %593 = vmatpush1.bf16.xpose.msra.mxu0 0
        %594 = vmatprep.subr.bf16.mxu0 0
        %595 = vmatpush1.bf16.xpose.msra.mxu0 0
        %596 = vmatprep.subr.bf16.mxu0 0
        %597 = vmatpush1.bf16.xpose.msra.mxu0 0
        %598 = vmatprep.mubr.bf16.mxu0 0
        %599 = vmatmul.mubr.bf16.gmra.mrb[0].mxu0 %v561
        %v600 = vpop.f32.mrb[0].mxu0
        %v601 = vadd.f32 0.0, %v600
        %v602 = vpop.f32.mrb[0].mxu0
        %v603 = vpop.f32.mrb[0].mxu0
        %v604 = vpop.f32.mrb[0].mxu0
        %605 = vdwg.mxu0
        %v606 = vsel %vm448, %v601, -inf
        %607 = vmax.xlane.f32.xlu0 %v606
        %v608 = vpop.xlane.xlu0 %607
        %v609 = vsub.f32 %v601, %v608
        %v610 = vmul.f32 %v609, 1.442695
        %v611 = vpow.pop %v610
        %v612 = vsel %vm448, %v611, 0.0
        %613 = vadd.xlane.f32.xlu0 %v612
        %v614 = vpop.xlane.xlu0 %613
        %v615 = vpack.c.bf16 %v611, %v611
        %616 = vrot.lane.b32.xlu0 %v445, 56
        %v617 = vpop.permute.xlu0 %616
        %v619 = vsel %vm448, %v615, 0
        %v622 = vsel %vm510, %v617, 0
        %624 = vmatprep.subr.bf16.mxu0 0
        %625 = vmatpush1.bf16.msra.mxu0 %v622
        %626 = vmatprep.subr.bf16.mxu0 0
        %627 = vmatpush1.bf16.msra.mxu0 0
        %628 = vmatprep.subr.bf16.mxu0 0
        %629 = vmatpush1.bf16.msra.mxu0 0
        %630 = vmatprep.subr.bf16.mxu0 0
        %631 = vmatpush1.bf16.msra.mxu0 0
        %632 = vmatprep.subr.bf16.mxu0 0
        %633 = vmatpush1.bf16.msra.mxu0 0
        %634 = vmatprep.subr.bf16.mxu0 0
        %635 = vmatpush1.bf16.msra.mxu0 0
        %636 = vmatprep.subr.bf16.mxu0 0
        %637 = vmatpush1.bf16.msra.mxu0 0
        %638 = vmatprep.subr.bf16.mxu0 0
        %639 = vmatpush1.bf16.msra.mxu0 0
        %640 = vmatprep.subr.bf16.mxu0 0
        %641 = vmatpush1.bf16.msra.mxu0 0
        %642 = vmatprep.subr.bf16.mxu0 0
        %643 = vmatpush1.bf16.msra.mxu0 0
        %644 = vmatprep.subr.bf16.mxu0 0
        %645 = vmatpush1.bf16.msra.mxu0 0
        %646 = vmatprep.subr.bf16.mxu0 0
        %647 = vmatpush1.bf16.msra.mxu0 0
        %648 = vmatprep.subr.bf16.mxu0 0
        %649 = vmatpush1.bf16.msra.mxu0 0
        %650 = vmatprep.subr.bf16.mxu0 0
        %651 = vmatpush1.bf16.msra.mxu0 0
        %652 = vmatprep.subr.bf16.mxu0 0
        %653 = vmatpush1.bf16.msra.mxu0 0
        %654 = vmatprep.subr.bf16.mxu0 0
        %655 = vmatpush1.bf16.msra.mxu0 0
        %656 = vmatprep.mubr.bf16.mxu0 0
        %657 = vmatmul.mubr.bf16.gmra.mrb[0].mxu0 %v619
        %v658 = vpop.f32.mrb[0].mxu0
        %v659 = vadd.f32 0.0, %v658
        %v660 = vpop.f32.mrb[0].mxu0
        %v661 = vpop.f32.mrb[0].mxu0
        %v662 = vpop.f32.mrb[0].mxu0
        %663 = vdwg.mxu0
        %v664 = vrcp.pop %v614
        %v665 = vmul.f32 %v659, %v664
        %666 = vrot.lane.b32.xlu0 %v445, 112
        %v667 = vpop.permute.xlu0 %666
        %668 = vrot.lane.b32.xlu0 %v445, 80
        %v669 = vpop.permute.xlu0 %668
        %v671 = vsel %vm448, %v667, 0
        %v674 = vsel %vm448, %v669, 0
        %676 = vmatprep.subr.bf16.mxu0 0
        %677 = vmatpush1.bf16.xpose.msra.mxu0 %v674
        %678 = vmatprep.subr.bf16.mxu0 0
        %679 = vmatpush1.bf16.xpose.msra.mxu0 0
        %680 = vmatprep.subr.bf16.mxu0 0
        %681 = vmatpush1.bf16.xpose.msra.mxu0 0
        %682 = vmatprep.subr.bf16.mxu0 0
        %683 = vmatpush1.bf16.xpose.msra.mxu0 0
        %684 = vmatprep.subr.bf16.mxu0 0
        %685 = vmatpush1.bf16.xpose.msra.mxu0 0
        %686 = vmatprep.subr.bf16.mxu0 0
        %687 = vmatpush1.bf16.xpose.msra.mxu0 0
        %688 = vmatprep.subr.bf16.mxu0 0
        %689 = vmatpush1.bf16.xpose.msra.mxu0 0
        %690 = vmatprep.subr.bf16.mxu0 0
        %691 = vmatpush1.bf16.xpose.msra.mxu0 0
        %692 = vmatprep.subr.bf16.mxu0 0
        %693 = vmatpush1.bf16.xpose.msra.mxu0 0
        %694 = vmatprep.subr.bf16.mxu0 0
        %695 = vmatpush1.bf16.xpose.msra.mxu0 0
        %696 = vmatprep.subr.bf16.mxu0 0
        %697 = vmatpush1.bf16.xpose.msra.mxu0 0
        %698 = vmatprep.subr.bf16.mxu0 0
        %699 = vmatpush1.bf16.xpose.msra.mxu0 0
        %700 = vmatprep.subr.bf16.mxu0 0
        %701 = vmatpush1.bf16.xpose.msra.mxu0 0
        %702 = vmatprep.subr.bf16.mxu0 0
        %703 = vmatpush1.bf16.xpose.msra.mxu0 0
        %704 = vmatprep.subr.bf16.mxu0 0
        %705 = vmatpush1.bf16.xpose.msra.mxu0 0
        %706 = vmatprep.subr.bf16.mxu0 0
        %707 = vmatpush1.bf16.xpose.msra.mxu0 0
        %708 = vmatprep.mubr.bf16.mxu0 0
        %709 = vmatmul.mubr.bf16.gmra.mrb[0].mxu0 %v671
        %v710 = vpop.f32.mrb[0].mxu0
        %v711 = vadd.f32 0.0, %v710
        %v712 = vpop.f32.mrb[0].mxu0
        %v713 = vpop.f32.mrb[0].mxu0
        %v714 = vpop.f32.mrb[0].mxu0
        %715 = vdwg.mxu0
        %v716 = vsel %vm448, %v711, -inf
        %717 = vmax.xlane.f32.xlu0 %v716
        %v718 = vpop.xlane.xlu0 %717
        %v719 = vsub.f32 %v711, %v718
        %v720 = vmul.f32 %v719, 1.442695
        %v721 = vpow.pop %v720
        %v722 = vsel %vm448, %v721, 0.0
        %723 = vadd.xlane.f32.xlu0 %v722
        %v724 = vpop.xlane.xlu0 %723
        %v725 = vpack.c.bf16 %v721, %v721
        %726 = vrot.lane.b32.xlu0 %v445, 48
        %v727 = vpop.permute.xlu0 %726
        %v729 = vsel %vm448, %v725, 0
        %v732 = vsel %vm510, %v727, 0
        %734 = vmatprep.subr.bf16.mxu0 0
        %735 = vmatpush1.bf16.msra.mxu0 %v732
        %736 = vmatprep.subr.bf16.mxu0 0
        %737 = vmatpush1.bf16.msra.mxu0 0
        %738 = vmatprep.subr.bf16.mxu0 0
        %739 = vmatpush1.bf16.msra.mxu0 0
        %740 = vmatprep.subr.bf16.mxu0 0
        %741 = vmatpush1.bf16.msra.mxu0 0
        %742 = vmatprep.subr.bf16.mxu0 0
        %743 = vmatpush1.bf16.msra.mxu0 0
        %744 = vmatprep.subr.bf16.mxu0 0
        %745 = vmatpush1.bf16.msra.mxu0 0
        %746 = vmatprep.subr.bf16.mxu0 0
        %747 = vmatpush1.bf16.msra.mxu0 0
        %748 = vmatprep.subr.bf16.mxu0 0
        %749 = vmatpush1.bf16.msra.mxu0 0
        %750 = vmatprep.subr.bf16.mxu0 0
        %751 = vmatpush1.bf16.msra.mxu0 0
        %752 = vmatprep.subr.bf16.mxu0 0
        %753 = vmatpush1.bf16.msra.mxu0 0
        %754 = vmatprep.subr.bf16.mxu0 0
        %755 = vmatpush1.bf16.msra.mxu0 0
        %756 = vmatprep.subr.bf16.mxu0 0
        %757 = vmatpush1.bf16.msra.mxu0 0
        %758 = vmatprep.subr.bf16.mxu0 0
        %759 = vmatpush1.bf16.msra.mxu0 0
        %760 = vmatprep.subr.bf16.mxu0 0
        %761 = vmatpush1.bf16.msra.mxu0 0
        %762 = vmatprep.subr.bf16.mxu0 0
        %763 = vmatpush1.bf16.msra.mxu0 0
        %764 = vmatprep.subr.bf16.mxu0 0
        %765 = vmatpush1.bf16.msra.mxu0 0
        %766 = vmatprep.mubr.bf16.mxu0 0
        %767 = vmatmul.mubr.bf16.gmra.mrb[0].mxu0 %v729
        %v768 = vpop.f32.mrb[0].mxu0
        %v769 = vadd.f32 0.0, %v768
        %v770 = vpop.f32.mrb[0].mxu0
        %v771 = vpop.f32.mrb[0].mxu0
        %v772 = vpop.f32.mrb[0].mxu0
        %773 = vdwg.mxu0
        %v774 = vrcp.pop %v724
        %v775 = vmul.f32 %v769, %v774
        %776 = vrot.lane.b32.xlu0 %v445, 104
        %v777 = vpop.permute.xlu0 %776
        %778 = vrot.lane.b32.xlu0 %v445, 72
        %v779 = vpop.permute.xlu0 %778
        %v781 = vsel %vm448, %v777, 0
        %v784 = vsel %vm448, %v779, 0
        %786 = vmatprep.subr.bf16.mxu0 0
        %787 = vmatpush1.bf16.xpose.msra.mxu0 %v784
        %788 = vmatprep.subr.bf16.mxu0 0
        %789 = vmatpush1.bf16.xpose.msra.mxu0 0
        %790 = vmatprep.subr.bf16.mxu0 0
        %791 = vmatpush1.bf16.xpose.msra.mxu0 0
        %792 = vmatprep.subr.bf16.mxu0 0
        %793 = vmatpush1.bf16.xpose.msra.mxu0 0
        %794 = vmatprep.subr.bf16.mxu0 0
        %795 = vmatpush1.bf16.xpose.msra.mxu0 0
        %796 = vmatprep.subr.bf16.mxu0 0
        %797 = vmatpush1.bf16.xpose.msra.mxu0 0
        %798 = vmatprep.subr.bf16.mxu0 0
        %799 = vmatpush1.bf16.xpose.msra.mxu0 0
        %800 = vmatprep.subr.bf16.mxu0 0
        %801 = vmatpush1.bf16.xpose.msra.mxu0 0
        %802 = vmatprep.subr.bf16.mxu0 0
        %803 = vmatpush1.bf16.xpose.msra.mxu0 0
        %804 = vmatprep.subr.bf16.mxu0 0
        %805 = vmatpush1.bf16.xpose.msra.mxu0 0
        %806 = vmatprep.subr.bf16.mxu0 0
        %807 = vmatpush1.bf16.xpose.msra.mxu0 0
        %808 = vmatprep.subr.bf16.mxu0 0
        %809 = vmatpush1.bf16.xpose.msra.mxu0 0
        %810 = vmatprep.subr.bf16.mxu0 0
        %811 = vmatpush1.bf16.xpose.msra.mxu0 0
        %812 = vmatprep.subr.bf16.mxu0 0
        %813 = vmatpush1.bf16.xpose.msra.mxu0 0
        %814 = vmatprep.subr.bf16.mxu0 0
        %815 = vmatpush1.bf16.xpose.msra.mxu0 0
        %816 = vmatprep.subr.bf16.mxu0 0
        %817 = vmatpush1.bf16.xpose.msra.mxu0 0
        %818 = vmatprep.mubr.bf16.mxu0 0
        %819 = vmatmul.mubr.bf16.gmra.mrb[0].mxu0 %v781
        %v820 = vpop.f32.mrb[0].mxu0
        %v821 = vadd.f32 0.0, %v820
        %v822 = vpop.f32.mrb[0].mxu0
        %v823 = vpop.f32.mrb[0].mxu0
        %v824 = vpop.f32.mrb[0].mxu0
        %825 = vdwg.mxu0
        %v826 = vsel %vm448, %v821, -inf
        %827 = vmax.xlane.f32.xlu0 %v826
        %v828 = vpop.xlane.xlu0 %827
        %v829 = vsub.f32 %v821, %v828
        %v830 = vmul.f32 %v829, 1.442695
        %v831 = vpow.pop %v830
        %v832 = vsel %vm448, %v831, 0.0
        %833 = vadd.xlane.f32.xlu0 %v832
        %v834 = vpop.xlane.xlu0 %833
        %v835 = vpack.c.bf16 %v831, %v831
        %836 = vrot.lane.b32.xlu0 %v445, 40
        %v837 = vpop.permute.xlu0 %836
        %v839 = vsel %vm448, %v835, 0
        %v842 = vsel %vm510, %v837, 0
        %844 = vmatprep.subr.bf16.mxu0 0
        %845 = vmatpush1.bf16.msra.mxu0 %v842
        %846 = vmatprep.subr.bf16.mxu0 0
        %847 = vmatpush1.bf16.msra.mxu0 0
        %848 = vmatprep.subr.bf16.mxu0 0
        %849 = vmatpush1.bf16.msra.mxu0 0
        %850 = vmatprep.subr.bf16.mxu0 0
        %851 = vmatpush1.bf16.msra.mxu0 0
        %852 = vmatprep.subr.bf16.mxu0 0
        %853 = vmatpush1.bf16.msra.mxu0 0
        %854 = vmatprep.subr.bf16.mxu0 0
        %855 = vmatpush1.bf16.msra.mxu0 0
        %856 = vmatprep.subr.bf16.mxu0 0
        %857 = vmatpush1.bf16.msra.mxu0 0
        %858 = vmatprep.subr.bf16.mxu0 0
        %859 = vmatpush1.bf16.msra.mxu0 0
        %860 = vmatprep.subr.bf16.mxu0 0
        %861 = vmatpush1.bf16.msra.mxu0 0
        %862 = vmatprep.subr.bf16.mxu0 0
        %863 = vmatpush1.bf16.msra.mxu0 0
        %864 = vmatprep.subr.bf16.mxu0 0
        %865 = vmatpush1.bf16.msra.mxu0 0
        %866 = vmatprep.subr.bf16.mxu0 0
        %867 = vmatpush1.bf16.msra.mxu0 0
        %868 = vmatprep.subr.bf16.mxu0 0
        %869 = vmatpush1.bf16.msra.mxu0 0
        %870 = vmatprep.subr.bf16.mxu0 0
        %871 = vmatpush1.bf16.msra.mxu0 0
        %872 = vmatprep.subr.bf16.mxu0 0
        %873 = vmatpush1.bf16.msra.mxu0 0
        %874 = vmatprep.subr.bf16.mxu0 0
        %875 = vmatpush1.bf16.msra.mxu0 0
        %876 = vmatprep.mubr.bf16.mxu0 0
        %877 = vmatmul.mubr.bf16.gmra.mrb[0].mxu0 %v839
        %v878 = vpop.f32.mrb[0].mxu0
        %v879 = vadd.f32 0.0, %v878
        %v880 = vpop.f32.mrb[0].mxu0
        %v881 = vpop.f32.mrb[0].mxu0
        %v882 = vpop.f32.mrb[0].mxu0
        %883 = vdwg.mxu0
        %v884 = vrcp.pop %v834
        %v885 = vmul.f32 %v879, %v884
        %887 = vrot.lane.b32.xlu0 %v665, 8
        %v888 = vpop.permute.xlu0 %887
        %891 = vrot.lane.b32.xlu0 %v775, 16
        %v892 = vpop.permute.xlu0 %891
        %895 = vrot.lane.b32.xlu0 %v885, 24
        %v896 = vpop.permute.xlu0 %895
        %v898 = vsel %vm448, %v555, %v888
        %vm899 = vcmask 130048
        %v900 = vsel %vm899, %v898, %v892
        %vm901 = vcmask 195584
        %v902 = vsel %vm901, %v900, %v896
        %v903 = vpack.c.bf16 %v902, %v902
        %vm904 = vcmask 257024
        %905 = vst.msk [vmem:[#allocation3] sm:$0xf] %vm904, %v903
        %v906 = vld [vmem:[#allocation3] sm:$0xf]
        %v907 = vld [vmem:[%s5] sm:$0xf]
        %v908 = vld [vmem:[%s5 + $0x4] sm:$0xf]
        %v909 = vld [vmem:[%s5 + $0x8] sm:$0xf]
        %v910 = vld [vmem:[%s5 + $0xc] sm:$0xf]
        %v911 = vld [vmem:[%s6] sm:$0x1]
        %v913 = vlaneseq
        %v914 = vshrl.u32 %v913, 7
        %v915 = vsub.s32 0, %v914
        %v916 = vrot.slane %v911, %v915
        %v922 = vunpack.c.l.b16 %v907
        %v923 = vunpack.c.l.b16 %v908
        %v924 = vunpack.c.l.b16 %v909
        %v925 = vunpack.c.l.b16 %v910
        %v926 = vpack.c.b16 %v923, %v922
        %v927 = vpack.c.b16 %v925, %v924
        %vm930 = vcmask 261120
        %v932 = vsel %vm930, %v906, 0
        %934 = vmatprep.subr.bf16.mxu0 0
        %935 = vmatpush1.bf16.msra.mxu0 %v926
        %936 = vmatprep.subr.bf16.mxu0 0
        %937 = vmatpush1.bf16.msra.mxu0 %v927
        %938 = vmatprep.subr.bf16.mxu0 0
        %939 = vmatpush1.bf16.msra.mxu0 0
        %940 = vmatprep.subr.bf16.mxu0 0
        %941 = vmatpush1.bf16.msra.mxu0 0
        %942 = vmatprep.subr.bf16.mxu0 0
        %943 = vmatpush1.bf16.msra.mxu0 0
        %944 = vmatprep.subr.bf16.mxu0 0
        %945 = vmatpush1.bf16.msra.mxu0 0
        %946 = vmatprep.subr.bf16.mxu0 0
        %947 = vmatpush1.bf16.msra.mxu0 0
        %948 = vmatprep.subr.bf16.mxu0 0
        %949 = vmatpush1.bf16.msra.mxu0 0
        %950 = vmatprep.subr.bf16.mxu0 0
        %951 = vmatpush1.bf16.msra.mxu0 0
        %952 = vmatprep.subr.bf16.mxu0 0
        %953 = vmatpush1.bf16.msra.mxu0 0
        %954 = vmatprep.subr.bf16.mxu0 0
        %955 = vmatpush1.bf16.msra.mxu0 0
        %956 = vmatprep.subr.bf16.mxu0 0
        %957 = vmatpush1.bf16.msra.mxu0 0
        %958 = vmatprep.subr.bf16.mxu0 0
        %959 = vmatpush1.bf16.msra.mxu0 0
        %960 = vmatprep.subr.bf16.mxu0 0
        %961 = vmatpush1.bf16.msra.mxu0 0
        %962 = vmatprep.subr.bf16.mxu0 0
        %963 = vmatpush1.bf16.msra.mxu0 0
        %964 = vmatprep.subr.bf16.mxu0 0
        %965 = vmatpush1.bf16.msra.mxu0 0
        %966 = vmatprep.mubr.bf16.mxu0 0
        %967 = vmatmul.mubr.bf16.gmra.mrb[0].mxu0 %v932
        %v968 = vpop.f32.mrb[0].mxu0
        %v969 = vadd.f32 %v916, %v968
        %v970 = vpop.f32.mrb[0].mxu0
        %v971 = vpop.f32.mrb[0].mxu0
        %v972 = vpop.f32.mrb[0].mxu0
        %973 = vdwg.mxu0
        %974 = vst.msk [vmem:[%s334] sm:$0xff] %vm930, %v969
        %s975 = sand.u32 %s199, 1
        %s976 = scalar_lea.sflag [#allocation6], %s975
        %s977 = sand.u32 %s199, 1
        %s978 = smul.addr %s977, 8
        %s979 = scalar_lea.vmem [#allocation10], %s978
        // Predicated region
        $region65: #{tpu_custom_call.1} parent=47 // pred_check
          %p980 = pneg %p209
        $region66: #{tpu_custom_call.1} parent=47 // pred_check_branch
          %982 = sbr.rel (%p980) target = $region68
        $region67: #{tpu_custom_call.1} parent=47 // pred_region
          %s984 = ssub.s32 128, 128
          %985 = vsyncadd %s976, %s984
          %s986 = sadd.s32 %s30, %s29
          %s987 = smul.addr %s986, 128
          %s988 = scalar_lea.hbm %s7, %s987
          %s990 = sshll.u32 %s979, 4
          %s991 = int_to_ptr.vmem [resolvable:$true] %s990
          %993 = dma.vmem_to_hbm [thread:$0]  %s991, 128, %s988, %s976
        $region68: #{tpu_custom_call.1} parent=47 // pred_fallthru
          _
      $region48: #{tpu_custom_call.1} parent=5 // pred_fallthru
        _
      %p994 = scmp.le.s32.totalorder 2, %s20
      // Predicated region
      $region69: #{tpu_custom_call.1} parent=5 // pred_check
        %p995 = pneg %p994
      $region70: #{tpu_custom_call.1} parent=5 // pred_check_branch
        %997 = sbr.rel (%p995) target = $region72
      $region71: #{tpu_custom_call.1} parent=5 // pred_region
        %s998 = ssub.s32 %s20, 2
        // Predicated region
        $region73: #{tpu_custom_call.1} parent=71 // pred_check
          %p999 = pneg %p215
        $region74: #{tpu_custom_call.1} parent=71 // pred_check_branch
          %1001 = sbr.rel (%p999) target = $region76
        $region75: #{tpu_custom_call.1} parent=71 // pred_region
          %s1002 = sand.u32 %s200, 1
          %s1003 = scalar_lea.sflag [#allocation6], %s1002
          %s1004 = sand.u32 %s200, 1
          %s1005 = smul.addr %s1004, 8
          %s1006 = scalar_lea.vmem [#allocation10], %s1005
          %1007 = dma.done %s1003, 128
        $region76: #{tpu_custom_call.1} parent=71 // pred_fallthru
          _
      $region72: #{tpu_custom_call.1} parent=5 // pred_fallthru
        _
    $region6: #{tpu_custom_call.1} parent=1 // loop_footer
      %s24 = sadd.s32 1, %s20
    $region7: #{tpu_custom_call.1} parent=1 // loop_footer_branch
      %19 = sbr.rel target = $region3
    $region8: #{tpu_custom_call.1} parent=1 // loop_exit
      _
    %1008 = vsyncpa [#allocation5], 1
    %s1009 = scalar_lea.sflag [#allocation5], 1
    %1010 = vsyncpa %s1009, 1
    %1011 = vsyncpa [#allocation8], 1
    %1012 = vsyncpa [#allocation6], 1
    %s1013 = scalar_lea.sflag [#allocation6], 1
    %1014 = vsyncpa %s1013, 1

</llo_original>
